<compile_context>
chip_gen: v5e
topology: v5e:2x2
jax: 0.10.0
libtpu: 0.0.40
codegen_flags: <defaults>
</compile_context>

<pallas_src>
import functools

import jax
import jax.numpy as jnp
from jax.experimental import pallas as pl
from jax.experimental.pallas import tpu as pltpu


def _dna_kernel(seq_ref, w1f_ref, w2_ref, fc_w_ref, fc_b_ref, out_ref,
                *, L, TB, k1, k2, act):
    # seq_ref : (M, 1)        int32  flattened token ids for TB sequences
    # w1f_ref : (5*k1, C1)    bf16   embedding-fused conv1 weights
    # w2_ref  : (k2, C1, C2)  bf16   conv2 weights
    # fc_w_ref: (C2, F_pad)   bf16   fc weights (lane-padded)
    # fc_b_ref: (1, F_pad)    f32    fc bias (lane-padded)
    M = seq_ref.shape[0]                      # TB * L
    C2 = w2_ref.shape[2]
    ids = seq_ref[...]                        # (M, 1) i32

    p1, p2 = k1 // 2, k2 // 2

    # position-within-sequence, built in-kernel (no DMA'd pos input)
    pos = jax.lax.broadcasted_iota(jnp.int32, (M, 1), 0) % L

    # validity masks per shift, built once and shared by both convs (prevents
    # the rolls from leaking across sequence boundaries inside the slab)
    shifts = sorted(set(range(-p1, k1 - p1)) | set(range(-p2, k2 - p2)))
    valid = {s: jnp.logical_and(pos + s >= 0, pos + s < L)
             for s in shifts if s != 0}

    # ---- conv1 with embedding folded in: one matmul over a shifted one-hot --
    # one-hot lane index for tap j, class c is 5*j + c; each tap only rolls the
    # 1-lane int32 id column, never a wide f32 slab.
    cls = jax.lax.broadcasted_iota(jnp.int32, (M, 5 * k1), 1)
    hit_any = None
    for j in range(k1):                                       # static unroll
        s = j - p1
        if s == 0:
            hit = cls == (5 * j + ids)
        else:
            ids_j = pltpu.roll(ids, shift=(-s) % M, axis=0)   # ids_j[m]=ids[m+s]
            hit = jnp.logical_and(cls == (5 * j + ids_j), valid[s])
        hit_any = hit if hit_any is None else jnp.logical_or(hit_any, hit)
    oh = hit_any.astype(jnp.bfloat16)                          # (M, 5*k1)
    h1 = act(jnp.dot(oh, w1f_ref[...],
                     preferred_element_type=jnp.float32))      # (M, C1) f32

    # ---- conv2: masked shifted copies, per-tap MXU matmul, f32 accumulate ---
    # TODO(synk): rolls kept in f32 (packed-bf16 sublane rolls are a Mosaic
    # lowering risk); only k2 casts remain per step.
    acc = jnp.zeros((M, C2), jnp.float32)
    for j in range(k2):                                        # static unroll
        s = j - p2
        if s == 0:
            piece = h1
        else:
            rolled = pltpu.roll(h1, shift=(-s) % M, axis=0)    # rolled[m]=h1[m+s]
            piece = jnp.where(valid[s], rolled, 0.0)
        acc = acc + jnp.dot(piece.astype(jnp.bfloat16), w2_ref[j],
                            preferred_element_type=jnp.float32)
    h2 = act(acc)                                              # (M, C2) f32

    # ---- AdaptiveAvgPool1d(1): per-sequence mean over L ---------------------
    if L % 8 == 0:
        # leading-dim split is layout-free when L % 8 == 0; cheap sublane sum
        pooled = jnp.sum(h2.reshape(TB, L, C2), axis=1) * (1.0 / L)
    else:
        # fallback: block-diagonal pooling matrix built in-kernel from iota
        row = jax.lax.broadcasted_iota(jnp.int32, (TB, M), 0)
        col = jax.lax.broadcasted_iota(jnp.int32, (TB, M), 1)
        pmat = (col // L == row).astype(jnp.bfloat16)
        pooled = jnp.dot(pmat, h2.astype(jnp.bfloat16),
                         preferred_element_type=jnp.float32) * (1.0 / L)

    # ---- fully connected + activation; lane-dense (F padded to 128) store ---
    y = jnp.dot(pooled.astype(jnp.bfloat16), fc_w_ref[...],
                preferred_element_type=jnp.float32) + fc_b_ref[...]
    out_ref[...] = act(y)                                      # (TB, F_pad)


def dna_forward(sequence, sequence_lengths, params, *, activation="relu"):
    # NOTE: sequence_lengths is unused, matching the PyTorch forward.
    del sequence_lengths
    B, L = sequence.shape
    emb_w = params["emb_w"]            # (5,  E)   padding row 4 is zero
    w1 = params["w1"]                  # (k1, E,  C1)
    w2 = params["w2"]                  # (k2, C1, C2)
    fc_w = params["fc_w"]              # (C2, F)
    fc_b = params["fc_b"]              # (1,  F)
    k1, _, C1 = w1.shape
    k2, _, C2 = w2.shape
    F = fc_w.shape[1]
    # 'same' conv path assumes odd kernels (PyTorch padding=k//2 with even k
    # changes the output length) -- fail loudly instead of shifting silently.
    assert k1 % 2 == 1 and k2 % 2 == 1, "kernel sizes must be odd"
    act = getattr(jax.nn, activation)

    # Fold embedding into conv1 (exact: no nonlinearity in between, and the
    # zero padding row 4 maps to an all-zero fused weight row).
    # w1_fused[5*j + c, :] = emb_w[c, :] @ w1[j]
    w1_fused = jnp.einsum("ce,keo->kco", emb_w, w1).reshape(k1 * 5, C1)
    w1_fused = w1_fused.astype(jnp.bfloat16)
    w2_b = w2.astype(jnp.bfloat16)

    # ---- batch tiling: TB sequences per grid step, M = TB*L ~ a few K rows --
    target_rows = 4096                 # per-step rows; sweep per generation
    TB = min(((B + 7) // 8) * 8,
             max(8, ((target_rows // max(L, 1) + 7) // 8) * 8))
    B_pad = ((B + TB - 1) // TB) * TB
    nb = B_pad // TB
    # keep >= 2 grid steps when the batch is large enough, so the "parallel"
    # grid axis can feed both of v7x's TensorCores
    if nb == 1 and TB > 8 and B > 8:
        TB = ((TB // 2 + 7) // 8) * 8
        B_pad = ((B + TB - 1) // TB) * TB
        nb = B_pad // TB
    M = TB * L

    seq = sequence.astype(jnp.int32)
    if B_pad != B:
        seq = jnp.pad(seq, ((0, B_pad - B), (0, 0)), constant_values=4)
    seq_flat = seq.reshape(B_pad * L, 1)                       # (B_pad*L, 1)

    # lane-dense output: pad F up to a multiple of 128 -> unmasked stores;
    # extra columns are sliced off afterwards (small output, low priority).
    F_pad = ((F + 127) // 128) * 128
    fc_w_b = jnp.pad(fc_w, ((0, 0), (0, F_pad - F))).astype(jnp.bfloat16)
    fc_b_p = jnp.pad(fc_b, ((0, 0), (0, F_pad - F))).astype(jnp.float32)

    kernel = functools.partial(_dna_kernel, L=L, TB=TB, k1=k1, k2=k2, act=act)
    out = pl.pallas_call(
        kernel,
        out_shape=jax.ShapeDtypeStruct((B_pad, F_pad), jnp.float32),
        grid_spec=pltpu.PrefetchScalarGridSpec(
            num_scalar_prefetch=0,
            grid=(nb,),
            in_specs=[
                pl.BlockSpec((M, 1), lambda b: (b, 0)),            # token ids
                pl.BlockSpec((k1 * 5, C1), lambda b: (0, 0)),      # fused conv1
                pl.BlockSpec((k2, C1, C2), lambda b: (0, 0, 0)),   # conv2 w
                pl.BlockSpec((C2, F_pad), lambda b: (0, 0)),       # fc w (pad)
                pl.BlockSpec((1, F_pad), lambda b: (0, 0)),        # fc b (pad)
            ],
            out_specs=pl.BlockSpec((TB, F_pad), lambda b: (b, 0)),
        ),
        compiler_params=pltpu.CompilerParams(
            dimension_semantics=("parallel",),
            vmem_limit_bytes=32 * 1024 * 1024),
    )(seq_flat, w1_fused, w2_b, fc_w_b, fc_b_p)
    return out[:B, :F]


def dna_forward_ref(sequence, params, activation="relu"):
    """Pure-JAX f32 reference mirroring the PyTorch module."""
    act = getattr(jax.nn, activation)
    x = params["emb_w"][sequence]                      # (B, L, E)
    x = jnp.transpose(x, (0, 2, 1))                    # (B, E, L)
    w1_t = jnp.transpose(params["w1"], (2, 1, 0))      # (C1, E, k1)
    p1 = w1_t.shape[2] // 2
    x = jax.lax.conv_general_dilated(
        x, w1_t, window_strides=(1,), padding=[(p1, p1)],
        dimension_numbers=("NCH", "OIH", "NCH"))
    x = act(x)
    w2_t = jnp.transpose(params["w2"], (2, 1, 0))      # (C2, C1, k2)
    p2 = w2_t.shape[2] // 2
    x = jax.lax.conv_general_dilated(
        x, w2_t, window_strides=(1,), padding=[(p2, p2)],
        dimension_numbers=("NCH", "OIH", "NCH"))
    x = act(x)
    pooled = jnp.mean(x, axis=2)                       # (B, C2)
    return act(pooled @ params["fc_w"] + params["fc_b"])


if __name__ == "__main__":
    config = dict(embedding_dim=16, num_filters_conv1=32, kernel_size_conv1=5,
                  num_filters_conv2=32, kernel_size_conv2=3, fc_size_dna=16,
                  activation_func="relu")
    B, L = 2, 16
    E = config["embedding_dim"]
    C1, k1 = config["num_filters_conv1"], config["kernel_size_conv1"]
    C2, k2 = config["num_filters_conv2"], config["kernel_size_conv2"]
    F = config["fc_size_dna"]

    key = jax.random.PRNGKey(0)
    k_seq, k_emb, k_w1, k_w2, k_fcw, k_fcb = jax.random.split(key, 6)

    sequence = jax.random.randint(k_seq, (B, L), 0, 5, dtype=jnp.int32)
    sequence_lengths = jnp.full((B,), L, dtype=jnp.int32)  # unused by forward

    # deterministic parameter init (nn.Embedding normal init, padding row 4 = 0;
    # conv1/conv2 are bias=False in the module, fc has a bias)
    emb_w = jax.random.normal(k_emb, (5, E), jnp.float32).at[4].set(0.0)
    w1 = jax.random.normal(k_w1, (k1, E, C1), jnp.float32) / (E * k1) ** 0.5
    w2 = jax.random.normal(k_w2, (k2, C1, C2), jnp.float32) / (C1 * k2) ** 0.5
    fc_w = jax.random.normal(k_fcw, (C2, F), jnp.float32) / C2 ** 0.5
    fc_b = 0.01 * jax.random.normal(k_fcb, (1, F), jnp.float32)
    params = dict(emb_w=emb_w, w1=w1, w2=w2, fc_w=fc_w, fc_b=fc_b)

    out = dna_forward(sequence, sequence_lengths, params,
                      activation=config["activation_func"])
    out = jax.block_until_ready(out)

    ref = dna_forward_ref(sequence, params, config["activation_func"])
    assert out.shape == (B, F)
    # bf16 MXU operands (f32 accumulation) -> loosened tolerance vs f32 ref.
    assert jnp.allclose(out, ref, atol=3e-2, rtol=3e-2)
    print("KERNEL_OK")
</pallas_src>

<mosaic_0001>
module attributes {stable_mosaic.version = 11 : i64} {
  func.func @_dna_kernel(%arg0: i32, %arg1: memref<128x1xi32, #tpu.memory_space<vmem>>, %arg2: memref<25x32xbf16, #tpu.memory_space<vmem>>, %arg3: memref<3x32x32xbf16, #tpu.memory_space<vmem>>, %arg4: memref<32x128xbf16, #tpu.memory_space<vmem>>, %arg5: memref<1x128xf32, #tpu.memory_space<vmem>>, %arg6: memref<8x128xf32, #tpu.memory_space<vmem>>) attributes {dimension_semantics = [#tpu.dimension_semantics<parallel>], iteration_bounds = array<i64: 1>, scalar_prefetch = 0 : i64, scratch_operands = 0 : i64, tpu.core_type = #tpu.core_type<tc>, window_params = [{transform_indices = @transform_0, window_bounds = array<i64: 128, 1>}, {pipeline_mode = #tpu.pipeline_mode<synchronous>, transform_indices = @transform_1, window_bounds = array<i64: 25, 32>}, {pipeline_mode = #tpu.pipeline_mode<synchronous>, transform_indices = @transform_2, window_bounds = array<i64: 3, 32, 32>}, {pipeline_mode = #tpu.pipeline_mode<synchronous>, transform_indices = @transform_3, window_bounds = array<i64: 32, 128>}, {pipeline_mode = #tpu.pipeline_mode<synchronous>, transform_indices = @transform_4, window_bounds = array<i64: 1, 128>}, {transform_indices = @transform_5, window_bounds = array<i64: 8, 128>}]} {
    %c0 = arith.constant 0 : index
    %c0_0 = arith.constant 0 : index
    %0 = vector.load %arg1[%c0, %c0_0] : memref<128x1xi32, #tpu.memory_space<vmem>>, vector<128x1xi32>
    %1 = tpu.iota {dimensions = array<i32: 0>} : vector<128x1xi32>
    %c16_i32 = arith.constant 16 : i32
    %c0_i32 = arith.constant 0 : i32
    %2 = arith.cmpi eq, %c16_i32, %c0_i32 : i32
    %c1_i32 = arith.constant 1 : i32
    %3 = arith.select %2, %c1_i32, %c16_i32 : i32
    %4 = vector.broadcast %3 : i32 to vector<128x1xi32>
    %5 = arith.remsi %1, %4 : vector<128x1xi32>
    %c0_i32_1 = arith.constant 0 : i32
    %6 = vector.broadcast %c0_i32_1 : i32 to vector<128x1xi32>
    %7 = arith.cmpi ne, %5, %6 : vector<128x1xi32>
    %c0_i32_2 = arith.constant 0 : i32
    %8 = vector.broadcast %c0_i32_2 : i32 to vector<128x1xi32>
    %9 = arith.cmpi slt, %5, %8 : vector<128x1xi32>
    %c0_i32_3 = arith.constant 0 : i32
    %10 = arith.cmpi slt, %3, %c0_i32_3 : i32
    %11 = vector.broadcast %10 : i1 to vector<128x1xi1>
    %12 = vector.broadcast %11 : vector<128x1xi1> to vector<128x1xi1>
    %13 = arith.xori %9, %12 : vector<128x1xi1>
    %14 = arith.andi %13, %7 : vector<128x1xi1>
    %15 = vector.broadcast %3 : i32 to vector<128x1xi32>
    %16 = arith.addi %5, %15 : vector<128x1xi32>
    %17 = arith.select %14, %16, %5 : vector<128x1xi1>, vector<128x1xi32>
    %c-2_i32 = arith.constant -2 : i32
    %18 = vector.broadcast %c-2_i32 : i32 to vector<128x1xi32>
    %19 = arith.addi %17, %18 : vector<128x1xi32>
    %c0_i32_4 = arith.constant 0 : i32
    %20 = vector.broadcast %c0_i32_4 : i32 to vector<128x1xi32>
    %21 = arith.cmpi sge, %19, %20 : vector<128x1xi32>
    %c-2_i32_5 = arith.constant -2 : i32
    %22 = vector.broadcast %c-2_i32_5 : i32 to vector<128x1xi32>
    %23 = arith.addi %17, %22 : vector<128x1xi32>
    %c16_i32_6 = arith.constant 16 : i32
    %24 = vector.broadcast %c16_i32_6 : i32 to vector<128x1xi32>
    %25 = arith.cmpi slt, %23, %24 : vector<128x1xi32>
    %26 = arith.andi %21, %25 : vector<128x1xi1>
    %c-1_i32 = arith.constant -1 : i32
    %27 = vector.broadcast %c-1_i32 : i32 to vector<128x1xi32>
    %28 = arith.addi %17, %27 : vector<128x1xi32>
    %c0_i32_7 = arith.constant 0 : i32
    %29 = vector.broadcast %c0_i32_7 : i32 to vector<128x1xi32>
    %30 = arith.cmpi sge, %28, %29 : vector<128x1xi32>
    %c-1_i32_8 = arith.constant -1 : i32
    %31 = vector.broadcast %c-1_i32_8 : i32 to vector<128x1xi32>
    %32 = arith.addi %17, %31 : vector<128x1xi32>
    %c16_i32_9 = arith.constant 16 : i32
    %33 = vector.broadcast %c16_i32_9 : i32 to vector<128x1xi32>
    %34 = arith.cmpi slt, %32, %33 : vector<128x1xi32>
    %35 = arith.andi %30, %34 : vector<128x1xi1>
    %c1_i32_10 = arith.constant 1 : i32
    %36 = vector.broadcast %c1_i32_10 : i32 to vector<128x1xi32>
    %37 = arith.addi %17, %36 : vector<128x1xi32>
    %c0_i32_11 = arith.constant 0 : i32
    %38 = vector.broadcast %c0_i32_11 : i32 to vector<128x1xi32>
    %39 = arith.cmpi sge, %37, %38 : vector<128x1xi32>
    %c1_i32_12 = arith.constant 1 : i32
    %40 = vector.broadcast %c1_i32_12 : i32 to vector<128x1xi32>
    %41 = arith.addi %17, %40 : vector<128x1xi32>
    %c16_i32_13 = arith.constant 16 : i32
    %42 = vector.broadcast %c16_i32_13 : i32 to vector<128x1xi32>
    %43 = arith.cmpi slt, %41, %42 : vector<128x1xi32>
    %44 = arith.andi %39, %43 : vector<128x1xi1>
    %c2_i32 = arith.constant 2 : i32
    %45 = vector.broadcast %c2_i32 : i32 to vector<128x1xi32>
    %46 = arith.addi %17, %45 : vector<128x1xi32>
    %c0_i32_14 = arith.constant 0 : i32
    %47 = vector.broadcast %c0_i32_14 : i32 to vector<128x1xi32>
    %48 = arith.cmpi sge, %46, %47 : vector<128x1xi32>
    %c2_i32_15 = arith.constant 2 : i32
    %49 = vector.broadcast %c2_i32_15 : i32 to vector<128x1xi32>
    %50 = arith.addi %17, %49 : vector<128x1xi32>
    %c16_i32_16 = arith.constant 16 : i32
    %51 = vector.broadcast %c16_i32_16 : i32 to vector<128x1xi32>
    %52 = arith.cmpi slt, %50, %51 : vector<128x1xi32>
    %53 = arith.andi %48, %52 : vector<128x1xi1>
    %54 = tpu.iota {dimensions = array<i32: 1>} : vector<128x25xi32>
    %c2_i32_17 = arith.constant 2 : i32
    %55 = tpu.dynamic_rotate %0 by %c2_i32_17 dim 0 : vector<128x1xi32>, i32 -> vector<128x1xi32>
    %c0_i32_18 = arith.constant 0 : i32
    %56 = vector.broadcast %c0_i32_18 : i32 to vector<128x1xi32>
    %57 = arith.addi %56, %55 : vector<128x1xi32>
    %58 = vector.broadcast %57 : vector<128x1xi32> to vector<128x25xi32>
    %59 = arith.cmpi eq, %54, %58 : vector<128x25xi32>
    %60 = vector.broadcast %26 : vector<128x1xi1> to vector<128x25xi1>
    %61 = arith.andi %59, %60 : vector<128x25xi1>
    %c1_i32_19 = arith.constant 1 : i32
    %62 = tpu.dynamic_rotate %0 by %c1_i32_19 dim 0 : vector<128x1xi32>, i32 -> vector<128x1xi32>
    %c5_i32 = arith.constant 5 : i32
    %63 = vector.broadcast %c5_i32 : i32 to vector<128x1xi32>
    %64 = arith.addi %63, %62 : vector<128x1xi32>
    %65 = vector.broadcast %64 : vector<128x1xi32> to vector<128x25xi32>
    %66 = arith.cmpi eq, %54, %65 : vector<128x25xi32>
    %67 = vector.broadcast %35 : vector<128x1xi1> to vector<128x25xi1>
    %68 = arith.andi %66, %67 : vector<128x25xi1>
    %69 = arith.ori %61, %68 : vector<128x25xi1>
    %c10_i32 = arith.constant 10 : i32
    %70 = vector.broadcast %c10_i32 : i32 to vector<128x1xi32>
    %71 = arith.addi %70, %0 : vector<128x1xi32>
    %72 = vector.broadcast %71 : vector<128x1xi32> to vector<128x25xi32>
    %73 = arith.cmpi eq, %54, %72 : vector<128x25xi32>
    %74 = arith.ori %69, %73 : vector<128x25xi1>
    %c127_i32 = arith.constant 127 : i32
    %75 = tpu.dynamic_rotate %0 by %c127_i32 dim 0 : vector<128x1xi32>, i32 -> vector<128x1xi32>
    %c15_i32 = arith.constant 15 : i32
    %76 = vector.broadcast %c15_i32 : i32 to vector<128x1xi32>
    %77 = arith.addi %76, %75 : vector<128x1xi32>
    %78 = vector.broadcast %77 : vector<128x1xi32> to vector<128x25xi32>
    %79 = arith.cmpi eq, %54, %78 : vector<128x25xi32>
    %80 = vector.broadcast %44 : vector<128x1xi1> to vector<128x25xi1>
    %81 = arith.andi %79, %80 : vector<128x25xi1>
    %82 = arith.ori %74, %81 : vector<128x25xi1>
    %c126_i32 = arith.constant 126 : i32
    %83 = tpu.dynamic_rotate %0 by %c126_i32 dim 0 : vector<128x1xi32>, i32 -> vector<128x1xi32>
    %c20_i32 = arith.constant 20 : i32
    %84 = vector.broadcast %c20_i32 : i32 to vector<128x1xi32>
    %85 = arith.addi %84, %83 : vector<128x1xi32>
    %86 = vector.broadcast %85 : vector<128x1xi32> to vector<128x25xi32>
    %87 = arith.cmpi eq, %54, %86 : vector<128x25xi32>
    %88 = vector.broadcast %53 : vector<128x1xi1> to vector<128x25xi1>
    %89 = arith.andi %87, %88 : vector<128x25xi1>
    %90 = arith.ori %82, %89 : vector<128x25xi1>
    %91 = arith.extui %90 : vector<128x25xi1> to vector<128x25xi32>
    %92 = arith.sitofp %91 : vector<128x25xi32> to vector<128x25xf32>
    %93 = arith.truncf %92 : vector<128x25xf32> to vector<128x25xbf16>
    %c0_20 = arith.constant 0 : index
    %c0_21 = arith.constant 0 : index
    %94 = vector.load %arg2[%c0_20, %c0_21] : memref<25x32xbf16, #tpu.memory_space<vmem>>, vector<25x32xbf16>
    %cst = arith.constant dense<0.000000e+00> : vector<128x32xf32>
    %95 = tpu.matmul %93, %94, %cst {dimension_numbers = #tpu.dot_dimension_numbers<[1], [0], [0], [1], [0, 0, 1, 1], [], []>} : vector<128x25xbf16>, vector<25x32xbf16>, vector<128x32xf32> -> vector<128x32xf32>
    %cst_22 = arith.constant 0.000000e+00 : f32
    %96 = vector.broadcast %cst_22 : f32 to vector<128x32xf32>
    %97 = arith.maximumf %95, %96 : vector<128x32xf32>
    %cst_23 = arith.constant 0.000000e+00 : f32
    %98 = vector.broadcast %cst_23 : f32 to vector<128x32xf32>
    %c1_i32_24 = arith.constant 1 : i32
    %99 = tpu.dynamic_rotate %97 by %c1_i32_24 dim 0 : vector<128x32xf32>, i32 -> vector<128x32xf32>
    %cst_25 = arith.constant 0.000000e+00 : f32
    %100 = vector.shape_cast %35 : vector<128x1xi1> to vector<128x1xi1>
    %101 = vector.broadcast %100 : vector<128x1xi1> to vector<128x32xi1>
    %102 = vector.broadcast %cst_25 : f32 to vector<128x32xf32>
    %103 = arith.select %101, %99, %102 : vector<128x32xi1>, vector<128x32xf32>
    %104 = arith.truncf %103 : vector<128x32xf32> to vector<128x32xbf16>
    %c0_26 = arith.constant 0 : index
    %c0_27 = arith.constant 0 : index
    %c0_28 = arith.constant 0 : index
    %105 = vector.load %arg3[%c0_26, %c0_27, %c0_28] : memref<3x32x32xbf16, #tpu.memory_space<vmem>>, vector<1x32x32xbf16>
    %106 = vector.shape_cast %105 : vector<1x32x32xbf16> to vector<32x32xbf16>
    %cst_29 = arith.constant dense<0.000000e+00> : vector<128x32xf32>
    %107 = tpu.matmul %104, %106, %cst_29 {dimension_numbers = #tpu.dot_dimension_numbers<[1], [0], [0], [1], [0, 0, 1, 1], [], []>} : vector<128x32xbf16>, vector<32x32xbf16>, vector<128x32xf32> -> vector<128x32xf32>
    %108 = arith.addf %98, %107 : vector<128x32xf32>
    %109 = arith.truncf %97 : vector<128x32xf32> to vector<128x32xbf16>
    %c1 = arith.constant 1 : index
    %c0_30 = arith.constant 0 : index
    %c0_31 = arith.constant 0 : index
    %110 = vector.load %arg3[%c1, %c0_30, %c0_31] : memref<3x32x32xbf16, #tpu.memory_space<vmem>>, vector<1x32x32xbf16>
    %111 = vector.shape_cast %110 : vector<1x32x32xbf16> to vector<32x32xbf16>
    %cst_32 = arith.constant dense<0.000000e+00> : vector<128x32xf32>
    %112 = tpu.matmul %109, %111, %cst_32 {dimension_numbers = #tpu.dot_dimension_numbers<[1], [0], [0], [1], [0, 0, 1, 1], [], []>} : vector<128x32xbf16>, vector<32x32xbf16>, vector<128x32xf32> -> vector<128x32xf32>
    %113 = arith.addf %108, %112 : vector<128x32xf32>
    %c127_i32_33 = arith.constant 127 : i32
    %114 = tpu.dynamic_rotate %97 by %c127_i32_33 dim 0 : vector<128x32xf32>, i32 -> vector<128x32xf32>
    %cst_34 = arith.constant 0.000000e+00 : f32
    %115 = vector.shape_cast %44 : vector<128x1xi1> to vector<128x1xi1>
    %116 = vector.broadcast %115 : vector<128x1xi1> to vector<128x32xi1>
    %117 = vector.broadcast %cst_34 : f32 to vector<128x32xf32>
    %118 = arith.select %116, %114, %117 : vector<128x32xi1>, vector<128x32xf32>
    %119 = arith.truncf %118 : vector<128x32xf32> to vector<128x32xbf16>
    %c2 = arith.constant 2 : index
    %c0_35 = arith.constant 0 : index
    %c0_36 = arith.constant 0 : index
    %120 = vector.load %arg3[%c2, %c0_35, %c0_36] : memref<3x32x32xbf16, #tpu.memory_space<vmem>>, vector<1x32x32xbf16>
    %121 = vector.shape_cast %120 : vector<1x32x32xbf16> to vector<32x32xbf16>
    %cst_37 = arith.constant dense<0.000000e+00> : vector<128x32xf32>
    %122 = tpu.matmul %119, %121, %cst_37 {dimension_numbers = #tpu.dot_dimension_numbers<[1], [0], [0], [1], [0, 0, 1, 1], [], []>} : vector<128x32xbf16>, vector<32x32xbf16>, vector<128x32xf32> -> vector<128x32xf32>
    %123 = arith.addf %113, %122 : vector<128x32xf32>
    %cst_38 = arith.constant 0.000000e+00 : f32
    %124 = vector.broadcast %cst_38 : f32 to vector<128x32xf32>
    %125 = arith.maximumf %123, %124 : vector<128x32xf32>
    %126 = vector.shape_cast %125 : vector<128x32xf32> to vector<8x16x32xf32>
    %cst_39 = arith.constant dense<0.000000e+00> : vector<8x32xf32>
    %127 = vector.multi_reduction <add>, %126, %cst_39 [1] : vector<8x16x32xf32> to vector<8x32xf32>
    %cst_40 = arith.constant 6.250000e-02 : f32
    %128 = vector.broadcast %cst_40 : f32 to vector<8x32xf32>
    %129 = arith.mulf %127, %128 : vector<8x32xf32>
    %130 = arith.truncf %129 : vector<8x32xf32> to vector<8x32xbf16>
    %c0_41 = arith.constant 0 : index
    %c0_42 = arith.constant 0 : index
    %131 = vector.load %arg4[%c0_41, %c0_42] : memref<32x128xbf16, #tpu.memory_space<vmem>>, vector<32x128xbf16>
    %cst_43 = arith.constant dense<0.000000e+00> : vector<8x128xf32>
    %132 = tpu.matmul %130, %131, %cst_43 {dimension_numbers = #tpu.dot_dimension_numbers<[1], [0], [0], [1], [0, 0, 1, 1], [], []>} : vector<8x32xbf16>, vector<32x128xbf16>, vector<8x128xf32> -> vector<8x128xf32>
    %c0_44 = arith.constant 0 : index
    %c0_45 = arith.constant 0 : index
    %133 = vector.load %arg5[%c0_44, %c0_45] : memref<1x128xf32, #tpu.memory_space<vmem>>, vector<1x128xf32>
    %134 = vector.broadcast %133 : vector<1x128xf32> to vector<8x128xf32>
    %135 = arith.addf %132, %134 : vector<8x128xf32>
    %cst_46 = arith.constant 0.000000e+00 : f32
    %136 = vector.broadcast %cst_46 : f32 to vector<8x128xf32>
    %137 = arith.maximumf %135, %136 : vector<8x128xf32>
    %c0_47 = arith.constant 0 : index
    %c0_48 = arith.constant 0 : index
    %138 = vector.load %arg6[%c0_47, %c0_48] : memref<8x128xf32, #tpu.memory_space<vmem>>, vector<8x128xf32>
    tpu.vector_store %arg6[%c0_47, %c0_48], %137 {strides = array<i32>} : memref<8x128xf32, #tpu.memory_space<vmem>>, vector<8x128xf32>,
    return
  }
  func.func @transform_0(%arg0: i32) -> (i32, i32) {
    %c0_i32 = arith.constant 0 : i32
    %c0_i32_0 = arith.constant 0 : i32
    return %arg0, %c0_i32 : i32, i32
  }
  func.func @transform_1(%arg0: i32) -> (i32, i32) {
    %c0_i32 = arith.constant 0 : i32
    %c0_i32_0 = arith.constant 0 : i32
    %c0_i32_1 = arith.constant 0 : i32
    return %c0_i32, %c0_i32_0 : i32, i32
  }
  func.func @transform_2(%arg0: i32) -> (i32, i32, i32) {
    %c0_i32 = arith.constant 0 : i32
    %c0_i32_0 = arith.constant 0 : i32
    %c0_i32_1 = arith.constant 0 : i32
    %c0_i32_2 = arith.constant 0 : i32
    return %c0_i32, %c0_i32_0, %c0_i32_1 : i32, i32, i32
  }
  func.func @transform_3(%arg0: i32) -> (i32, i32) {
    %c0_i32 = arith.constant 0 : i32
    %c0_i32_0 = arith.constant 0 : i32
    %c0_i32_1 = arith.constant 0 : i32
    return %c0_i32, %c0_i32_0 : i32, i32
  }
  func.func @transform_4(%arg0: i32) -> (i32, i32) {
    %c0_i32 = arith.constant 0 : i32
    %c0_i32_0 = arith.constant 0 : i32
    %c0_i32_1 = arith.constant 0 : i32
    return %c0_i32, %c0_i32_0 : i32, i32
  }
  func.func @transform_5(%arg0: i32) -> (i32, i32) {
    %c0_i32 = arith.constant 0 : i32
    %c0_i32_0 = arith.constant 0 : i32
    return %arg0, %c0_i32 : i32, i32
  }
}

</mosaic_0001>

<llo_original>
// kernel: tpu_custom_call.1
$region0: #{tpu_custom_call.1}
  #allocation0 [shape = 'u32[]', space=smem, size = 0x4, offset = 0x4, fixed_abs, tag = 'smem constant byte address 0x4 - core index']
  #allocation1 [shape = 'u32[72,128]{1,0:T(1,128)}', space=vmem, size = 0x9000, scoped, tag = 'internal scratch']
  %s0 = inlined_call_operand.vmem [shape: s32[128,1], index: 0, kind: input, shape index: {}]
  %s1 = inlined_call_operand.vmem [shape: bf16[25,32], index: 1, kind: input, shape index: {}]
  %s2 = inlined_call_operand.vmem [shape: bf16[3,32,32], index: 2, kind: input, shape index: {}]
  %s3 = inlined_call_operand.vmem [shape: bf16[32,128], index: 3, kind: input, shape index: {}]
  %s4 = inlined_call_operand.vmem [shape: f32[1,128], index: 4, kind: input, shape index: {}]
  %s5 = inlined_call_operand.hbm [shape: f32[8,128], index: 5, kind: output, shape index: {}]
  %s6 = sld [smem:[#allocation0]]
  $region30: #{tpu_custom_call.1} parent=0
    _
  %s8 = ssub.s32 1, %s6
  %s9 = scalar_select 0, %s8, %s6
  $region1: #{tpu_custom_call.1} parent=0
    #allocation2 [shape = 'u8[4096]{0}', space=vmem, size = 0x1000, scoped, tag = 'output window, operand 0, single buffered']
    #allocation3 [shape = 's32[1]{0}', space=sflag, size = 0x4, scoped, tag = 'scoped memory for tpu_custom_call.1']
    %10 = vsyncpa [#allocation3], 0
    // Predicated region
    $region2: #{tpu_custom_call.1} parent=1 // pred_check
      _
    $region3: #{tpu_custom_call.1} parent=1 // pred_check_branch
      %12 = sbr.rel (0) target = $region5
    $region4: #{tpu_custom_call.1} parent=1 // pred_region
      _
    $region5: #{tpu_custom_call.1} parent=1 // pred_fallthru
      _
    // Predicated region
    $region6: #{tpu_custom_call.1} parent=1 // pred_check
      _
    $region7: #{tpu_custom_call.1} parent=1 // pred_check_branch
      %14 = sbr.rel (0) target = $region9
    $region8: #{tpu_custom_call.1} parent=1 // pred_region
      _
    $region9: #{tpu_custom_call.1} parent=1 // pred_fallthru
      _
    // Predicated region
    $region10: #{tpu_custom_call.1} parent=1 // pred_check
      _
    $region11: #{tpu_custom_call.1} parent=1 // pred_check_branch
      %16 = sbr.rel (0) target = $region13
    $region12: #{tpu_custom_call.1} parent=1 // pred_region
      _
    $region13: #{tpu_custom_call.1} parent=1 // pred_fallthru
      _
    // Predicated region
    $region14: #{tpu_custom_call.1} parent=1 // pred_check
      _
    $region15: #{tpu_custom_call.1} parent=1 // pred_check_branch
      %18 = sbr.rel (0) target = $region17
    $region16: #{tpu_custom_call.1} parent=1 // pred_region
      _
    $region17: #{tpu_custom_call.1} parent=1 // pred_fallthru
      _
    // Predicated region
    $region18: #{tpu_custom_call.1} parent=1 // pred_check
      _
    $region19: #{tpu_custom_call.1} parent=1 // pred_check_branch
      %20 = sbr.rel (0) target = $region21
    $region20: #{tpu_custom_call.1} parent=1 // pred_region
      _
    $region21: #{tpu_custom_call.1} parent=1 // pred_fallthru
      _
    %v22 = vld [vmem:[%s0] sm:$0xff]
    %v23 = vld [vmem:[%s0 + $0x8] sm:$0xff]
    %v24 = vld [vmem:[%s0 + $0x10] sm:$0xff]
    %v25 = vld [vmem:[%s0 + $0x18] sm:$0xff]
    %v26 = vld [vmem:[%s0 + $0x20] sm:$0xff]
    %v27 = vld [vmem:[%s0 + $0x28] sm:$0xff]
    %v28 = vld [vmem:[%s0 + $0x30] sm:$0xff]
    %v29 = vld [vmem:[%s0 + $0x38] sm:$0xff]
    %v30 = vld [vmem:[%s0 + $0x40] sm:$0xff]
    %v31 = vld [vmem:[%s0 + $0x48] sm:$0xff]
    %v32 = vld [vmem:[%s0 + $0x50] sm:$0xff]
    %v33 = vld [vmem:[%s0 + $0x58] sm:$0xff]
    %v34 = vld [vmem:[%s0 + $0x60] sm:$0xff]
    %v35 = vld [vmem:[%s0 + $0x68] sm:$0xff]
    %v36 = vld [vmem:[%s0 + $0x70] sm:$0xff]
    %v37 = vld [vmem:[%s0 + $0x78] sm:$0xff]
    %v38 = vlaneseq
    %v39 = vshrl.u32 %v38, 7
    %v40 = vadd.s32 %v39, 8
    %v41 = vadd.s32 %v39, 16
    %v42 = vadd.s32 %v39, 24
    %v43 = vadd.s32 %v39, 32
    %v44 = vadd.s32 %v39, 40
    %v45 = vadd.s32 %v39, 48
    %v46 = vadd.s32 %v39, 56
    %v47 = vadd.s32 %v39, 64
    %v48 = vadd.s32 %v39, 72
    %v49 = vadd.s32 %v39, 80
    %v50 = vadd.s32 %v39, 88
    %v51 = vadd.s32 %v39, 96
    %v52 = vadd.s32 %v39, 104
    %v53 = vadd.s32 %v39, 112
    %v54 = vadd.s32 %v39, 120
    %vm55 = vcmp.lt.s32.totalorder %v39, 0
    %v56 = vsub.s32 0, %v39
    %v57 = vsel %vm55, %v56, %v39
    %v58 = vshrl.u32 %v57, 4
    %v59 = vand.u32 %v57, 15
    %v60 = vsub.s32 0, %v59
    %v61 = vsel %vm55, %v60, %v59
    %vm62 = vcmp.lt.s32.totalorder %v40, 0
    %v63 = vsub.s32 0, %v40
    %v64 = vsel %vm62, %v63, %v40
    %v65 = vshrl.u32 %v64, 4
    %v66 = vand.u32 %v64, 15
    %v67 = vsub.s32 0, %v66
    %v68 = vsel %vm62, %v67, %v66
    %vm69 = vcmp.lt.s32.totalorder %v41, 0
    %v70 = vsub.s32 0, %v41
    %v71 = vsel %vm69, %v70, %v41
    %v72 = vshrl.u32 %v71, 4
    %v73 = vand.u32 %v71, 15
    %v74 = vsub.s32 0, %v73
    %v75 = vsel %vm69, %v74, %v73
    %vm76 = vcmp.lt.s32.totalorder %v42, 0
    %v77 = vsub.s32 0, %v42
    %v78 = vsel %vm76, %v77, %v42
    %v79 = vshrl.u32 %v78, 4
    %v80 = vand.u32 %v78, 15
    %v81 = vsub.s32 0, %v80
    %v82 = vsel %vm76, %v81, %v80
    %vm83 = vcmp.lt.s32.totalorder %v43, 0
    %v84 = vsub.s32 0, %v43
    %v85 = vsel %vm83, %v84, %v43
    %v86 = vshrl.u32 %v85, 4
    %v87 = vand.u32 %v85, 15
    %v88 = vsub.s32 0, %v87
    %v89 = vsel %vm83, %v88, %v87
    %vm90 = vcmp.lt.s32.totalorder %v44, 0
    %v91 = vsub.s32 0, %v44
    %v92 = vsel %vm90, %v91, %v44
    %v93 = vshrl.u32 %v92, 4
    %v94 = vand.u32 %v92, 15
    %v95 = vsub.s32 0, %v94
    %v96 = vsel %vm90, %v95, %v94
    %vm97 = vcmp.lt.s32.totalorder %v45, 0
    %v98 = vsub.s32 0, %v45
    %v99 = vsel %vm97, %v98, %v45
    %v100 = vshrl.u32 %v99, 4
    %v101 = vand.u32 %v99, 15
    %v102 = vsub.s32 0, %v101
    %v103 = vsel %vm97, %v102, %v101
    %vm104 = vcmp.lt.s32.totalorder %v46, 0
    %v105 = vsub.s32 0, %v46
    %v106 = vsel %vm104, %v105, %v46
    %v107 = vshrl.u32 %v106, 4
    %v108 = vand.u32 %v106, 15
    %v109 = vsub.s32 0, %v108
    %v110 = vsel %vm104, %v109, %v108
    %vm111 = vcmp.lt.s32.totalorder %v47, 0
    %v112 = vsub.s32 0, %v47
    %v113 = vsel %vm111, %v112, %v47
    %v114 = vshrl.u32 %v113, 4
    %v115 = vand.u32 %v113, 15
    %v116 = vsub.s32 0, %v115
    %v117 = vsel %vm111, %v116, %v115
    %vm118 = vcmp.lt.s32.totalorder %v48, 0
    %v119 = vsub.s32 0, %v48
    %v120 = vsel %vm118, %v119, %v48
    %v121 = vshrl.u32 %v120, 4
    %v122 = vand.u32 %v120, 15
    %v123 = vsub.s32 0, %v122
    %v124 = vsel %vm118, %v123, %v122
    %vm125 = vcmp.lt.s32.totalorder %v49, 0
    %v126 = vsub.s32 0, %v49
    %v127 = vsel %vm125, %v126, %v49
    %v128 = vshrl.u32 %v127, 4
    %v129 = vand.u32 %v127, 15
    %v130 = vsub.s32 0, %v129
    %v131 = vsel %vm125, %v130, %v129
    %vm132 = vcmp.lt.s32.totalorder %v50, 0
    %v133 = vsub.s32 0, %v50
    %v134 = vsel %vm132, %v133, %v50
    %v135 = vshrl.u32 %v134, 4
    %v136 = vand.u32 %v134, 15
    %v137 = vsub.s32 0, %v136
    %v138 = vsel %vm132, %v137, %v136
    %vm139 = vcmp.lt.s32.totalorder %v51, 0
    %v140 = vsub.s32 0, %v51
    %v141 = vsel %vm139, %v140, %v51
    %v142 = vshrl.u32 %v141, 4
    %v143 = vand.u32 %v141, 15
    %v144 = vsub.s32 0, %v143
    %v145 = vsel %vm139, %v144, %v143
    %vm146 = vcmp.lt.s32.totalorder %v52, 0
    %v147 = vsub.s32 0, %v52
    %v148 = vsel %vm146, %v147, %v52
    %v149 = vshrl.u32 %v148, 4
    %v150 = vand.u32 %v148, 15
    %v151 = vsub.s32 0, %v150
    %v152 = vsel %vm146, %v151, %v150
    %vm153 = vcmp.lt.s32.totalorder %v53, 0
    %v154 = vsub.s32 0, %v53
    %v155 = vsel %vm153, %v154, %v53
    %v156 = vshrl.u32 %v155, 4
    %v157 = vand.u32 %v155, 15
    %v158 = vsub.s32 0, %v157
    %v159 = vsel %vm153, %v158, %v157
    %vm160 = vcmp.lt.s32.totalorder %v54, 0
    %v161 = vsub.s32 0, %v54
    %v162 = vsel %vm160, %v161, %v54
    %v163 = vshrl.u32 %v162, 4
    %v164 = vand.u32 %v162, 15
    %v165 = vsub.s32 0, %v164
    %v166 = vsel %vm160, %v165, %v164
    %vm167 = vcmp.ne.s32.totalorder %v61, 0
    %vm168 = vcmp.ne.s32.totalorder %v68, 0
    %vm169 = vcmp.ne.s32.totalorder %v75, 0
    %vm170 = vcmp.ne.s32.totalorder %v82, 0
    %vm171 = vcmp.ne.s32.totalorder %v89, 0
    %vm172 = vcmp.ne.s32.totalorder %v96, 0
    %vm173 = vcmp.ne.s32.totalorder %v103, 0
    %vm174 = vcmp.ne.s32.totalorder %v110, 0
    %vm175 = vcmp.ne.s32.totalorder %v117, 0
    %vm176 = vcmp.ne.s32.totalorder %v124, 0
    %vm177 = vcmp.ne.s32.totalorder %v131, 0
    %vm178 = vcmp.ne.s32.totalorder %v138, 0
    %vm179 = vcmp.ne.s32.totalorder %v145, 0
    %vm180 = vcmp.ne.s32.totalorder %v152, 0
    %vm181 = vcmp.ne.s32.totalorder %v159, 0
    %vm182 = vcmp.ne.s32.totalorder %v166, 0
    %vm183 = vcmp.lt.s32.totalorder %v61, 0
    %vm184 = vcmp.lt.s32.totalorder %v68, 0
    %vm185 = vcmp.lt.s32.totalorder %v75, 0
    %vm186 = vcmp.lt.s32.totalorder %v82, 0
    %vm187 = vcmp.lt.s32.totalorder %v89, 0
    %vm188 = vcmp.lt.s32.totalorder %v96, 0
    %vm189 = vcmp.lt.s32.totalorder %v103, 0
    %vm190 = vcmp.lt.s32.totalorder %v110, 0
    %vm191 = vcmp.lt.s32.totalorder %v117, 0
    %vm192 = vcmp.lt.s32.totalorder %v124, 0
    %vm193 = vcmp.lt.s32.totalorder %v131, 0
    %vm194 = vcmp.lt.s32.totalorder %v138, 0
    %vm195 = vcmp.lt.s32.totalorder %v145, 0
    %vm196 = vcmp.lt.s32.totalorder %v152, 0
    %vm197 = vcmp.lt.s32.totalorder %v159, 0
    %vm198 = vcmp.lt.s32.totalorder %v166, 0
    %vm199 = vmand %vm183, %vm167
    %vm200 = vmand %vm184, %vm168
    %vm201 = vmand %vm185, %vm169
    %vm202 = vmand %vm186, %vm170
    %vm203 = vmand %vm187, %vm171
    %vm204 = vmand %vm188, %vm172
    %vm205 = vmand %vm189, %vm173
    %vm206 = vmand %vm190, %vm174
    %vm207 = vmand %vm191, %vm175
    %vm208 = vmand %vm192, %vm176
    %vm209 = vmand %vm193, %vm177
    %vm210 = vmand %vm194, %vm178
    %vm211 = vmand %vm195, %vm179
    %vm212 = vmand %vm196, %vm180
    %vm213 = vmand %vm197, %vm181
    %vm214 = vmand %vm198, %vm182
    %v215 = vadd.s32 %v61, 16
    %v216 = vadd.s32 %v68, 16
    %v217 = vadd.s32 %v75, 16
    %v218 = vadd.s32 %v82, 16
    %v219 = vadd.s32 %v89, 16
    %v220 = vadd.s32 %v96, 16
    %v221 = vadd.s32 %v103, 16
    %v222 = vadd.s32 %v110, 16
    %v223 = vadd.s32 %v117, 16
    %v224 = vadd.s32 %v124, 16
    %v225 = vadd.s32 %v131, 16
    %v226 = vadd.s32 %v138, 16
    %v227 = vadd.s32 %v145, 16
    %v228 = vadd.s32 %v152, 16
    %v229 = vadd.s32 %v159, 16
    %v230 = vadd.s32 %v166, 16
    %v231 = vsel %vm199, %v215, %v61
    %v232 = vsel %vm200, %v216, %v68
    %v233 = vsel %vm201, %v217, %v75
    %v234 = vsel %vm202, %v218, %v82
    %v235 = vsel %vm203, %v219, %v89
    %v236 = vsel %vm204, %v220, %v96
    %v237 = vsel %vm205, %v221, %v103
    %v238 = vsel %vm206, %v222, %v110
    %v239 = vsel %vm207, %v223, %v117
    %v240 = vsel %vm208, %v224, %v124
    %v241 = vsel %vm209, %v225, %v131
    %v242 = vsel %vm210, %v226, %v138
    %v243 = vsel %vm211, %v227, %v145
    %v244 = vsel %vm212, %v228, %v152
    %v245 = vsel %vm213, %v229, %v159
    %v246 = vsel %vm214, %v230, %v166
    %v247 = vadd.s32 %v231, 4294967294
    %v248 = vadd.s32 %v232, 4294967294
    %v249 = vadd.s32 %v233, 4294967294
    %v250 = vadd.s32 %v234, 4294967294
    %v251 = vadd.s32 %v235, 4294967294
    %v252 = vadd.s32 %v236, 4294967294
    %v253 = vadd.s32 %v237, 4294967294
    %v254 = vadd.s32 %v238, 4294967294
    %v255 = vadd.s32 %v239, 4294967294
    %v256 = vadd.s32 %v240, 4294967294
    %v257 = vadd.s32 %v241, 4294967294
    %v258 = vadd.s32 %v242, 4294967294
    %v259 = vadd.s32 %v243, 4294967294
    %v260 = vadd.s32 %v244, 4294967294
    %v261 = vadd.s32 %v245, 4294967294
    %v262 = vadd.s32 %v246, 4294967294
    %vm263 = vcmp.ge.s32.totalorder %v247, 0
    %vm264 = vcmp.ge.s32.totalorder %v248, 0
    %vm265 = vcmp.ge.s32.totalorder %v249, 0
    %vm266 = vcmp.ge.s32.totalorder %v250, 0
    %vm267 = vcmp.ge.s32.totalorder %v251, 0
    %vm268 = vcmp.ge.s32.totalorder %v252, 0
    %vm269 = vcmp.ge.s32.totalorder %v253, 0
    %vm270 = vcmp.ge.s32.totalorder %v254, 0
    %vm271 = vcmp.ge.s32.totalorder %v255, 0
    %vm272 = vcmp.ge.s32.totalorder %v256, 0
    %vm273 = vcmp.ge.s32.totalorder %v257, 0
    %vm274 = vcmp.ge.s32.totalorder %v258, 0
    %vm275 = vcmp.ge.s32.totalorder %v259, 0
    %vm276 = vcmp.ge.s32.totalorder %v260, 0
    %vm277 = vcmp.ge.s32.totalorder %v261, 0
    %vm278 = vcmp.ge.s32.totalorder %v262, 0
    %vm279 = vcmp.lt.s32.totalorder %v247, 16
    %vm280 = vcmp.lt.s32.totalorder %v248, 16
    %vm281 = vcmp.lt.s32.totalorder %v249, 16
    %vm282 = vcmp.lt.s32.totalorder %v250, 16
    %vm283 = vcmp.lt.s32.totalorder %v251, 16
    %vm284 = vcmp.lt.s32.totalorder %v252, 16
    %vm285 = vcmp.lt.s32.totalorder %v253, 16
    %vm286 = vcmp.lt.s32.totalorder %v254, 16
    %vm287 = vcmp.lt.s32.totalorder %v255, 16
    %vm288 = vcmp.lt.s32.totalorder %v256, 16
    %vm289 = vcmp.lt.s32.totalorder %v257, 16
    %vm290 = vcmp.lt.s32.totalorder %v258, 16
    %vm291 = vcmp.lt.s32.totalorder %v259, 16
    %vm292 = vcmp.lt.s32.totalorder %v260, 16
    %vm293 = vcmp.lt.s32.totalorder %v261, 16
    %vm294 = vcmp.lt.s32.totalorder %v262, 16
    %vm295 = vmand %vm263, %vm279
    %vm296 = vmand %vm264, %vm280
    %vm297 = vmand %vm265, %vm281
    %vm298 = vmand %vm266, %vm282
    %vm299 = vmand %vm267, %vm283
    %vm300 = vmand %vm268, %vm284
    %vm301 = vmand %vm269, %vm285
    %vm302 = vmand %vm270, %vm286
    %vm303 = vmand %vm271, %vm287
    %vm304 = vmand %vm272, %vm288
    %vm305 = vmand %vm273, %vm289
    %vm306 = vmand %vm274, %vm290
    %vm307 = vmand %vm275, %vm291
    %vm308 = vmand %vm276, %vm292
    %vm309 = vmand %vm277, %vm293
    %vm310 = vmand %vm278, %vm294
    %v311 = vadd.s32 %v231, 4294967295
    %v312 = vadd.s32 %v232, 4294967295
    %v313 = vadd.s32 %v233, 4294967295
    %v314 = vadd.s32 %v234, 4294967295
    %v315 = vadd.s32 %v235, 4294967295
    %v316 = vadd.s32 %v236, 4294967295
    %v317 = vadd.s32 %v237, 4294967295
    %v318 = vadd.s32 %v238, 4294967295
    %v319 = vadd.s32 %v239, 4294967295
    %v320 = vadd.s32 %v240, 4294967295
    %v321 = vadd.s32 %v241, 4294967295
    %v322 = vadd.s32 %v242, 4294967295
    %v323 = vadd.s32 %v243, 4294967295
    %v324 = vadd.s32 %v244, 4294967295
    %v325 = vadd.s32 %v245, 4294967295
    %v326 = vadd.s32 %v246, 4294967295
    %vm327 = vcmp.ge.s32.totalorder %v311, 0
    %vm328 = vcmp.ge.s32.totalorder %v312, 0
    %vm329 = vcmp.ge.s32.totalorder %v313, 0
    %vm330 = vcmp.ge.s32.totalorder %v314, 0
    %vm331 = vcmp.ge.s32.totalorder %v315, 0
    %vm332 = vcmp.ge.s32.totalorder %v316, 0
    %vm333 = vcmp.ge.s32.totalorder %v317, 0
    %vm334 = vcmp.ge.s32.totalorder %v318, 0
    %vm335 = vcmp.ge.s32.totalorder %v319, 0
    %vm336 = vcmp.ge.s32.totalorder %v320, 0
    %vm337 = vcmp.ge.s32.totalorder %v321, 0
    %vm338 = vcmp.ge.s32.totalorder %v322, 0
    %vm339 = vcmp.ge.s32.totalorder %v323, 0
    %vm340 = vcmp.ge.s32.totalorder %v324, 0
    %vm341 = vcmp.ge.s32.totalorder %v325, 0
    %vm342 = vcmp.ge.s32.totalorder %v326, 0
    %vm343 = vcmp.lt.s32.totalorder %v311, 16
    %vm344 = vcmp.lt.s32.totalorder %v312, 16
    %vm345 = vcmp.lt.s32.totalorder %v313, 16
    %vm346 = vcmp.lt.s32.totalorder %v314, 16
    %vm347 = vcmp.lt.s32.totalorder %v315, 16
    %vm348 = vcmp.lt.s32.totalorder %v316, 16
    %vm349 = vcmp.lt.s32.totalorder %v317, 16
    %vm350 = vcmp.lt.s32.totalorder %v318, 16
    %vm351 = vcmp.lt.s32.totalorder %v319, 16
    %vm352 = vcmp.lt.s32.totalorder %v320, 16
    %vm353 = vcmp.lt.s32.totalorder %v321, 16
    %vm354 = vcmp.lt.s32.totalorder %v322, 16
    %vm355 = vcmp.lt.s32.totalorder %v323, 16
    %vm356 = vcmp.lt.s32.totalorder %v324, 16
    %vm357 = vcmp.lt.s32.totalorder %v325, 16
    %vm358 = vcmp.lt.s32.totalorder %v326, 16
    %vm359 = vmand %vm327, %vm343
    %vm360 = vmand %vm328, %vm344
    %vm361 = vmand %vm329, %vm345
    %vm362 = vmand %vm330, %vm346
    %vm363 = vmand %vm331, %vm347
    %vm364 = vmand %vm332, %vm348
    %vm365 = vmand %vm333, %vm349
    %vm366 = vmand %vm334, %vm350
    %vm367 = vmand %vm335, %vm351
    %vm368 = vmand %vm336, %vm352
    %vm369 = vmand %vm337, %vm353
    %vm370 = vmand %vm338, %vm354
    %vm371 = vmand %vm339, %vm355
    %vm372 = vmand %vm340, %vm356
    %vm373 = vmand %vm341, %vm357
    %vm374 = vmand %vm342, %vm358
    %v375 = vadd.s32 %v231, 1
    %v376 = vadd.s32 %v232, 1
    %v377 = vadd.s32 %v233, 1
    %v378 = vadd.s32 %v234, 1
    %v379 = vadd.s32 %v235, 1
    %v380 = vadd.s32 %v236, 1
    %v381 = vadd.s32 %v237, 1
    %v382 = vadd.s32 %v238, 1
    %v383 = vadd.s32 %v239, 1
    %v384 = vadd.s32 %v240, 1
    %v385 = vadd.s32 %v241, 1
    %v386 = vadd.s32 %v242, 1
    %v387 = vadd.s32 %v243, 1
    %v388 = vadd.s32 %v244, 1
    %v389 = vadd.s32 %v245, 1
    %v390 = vadd.s32 %v246, 1
    %vm391 = vcmp.ge.s32.totalorder %v375, 0
    %vm392 = vcmp.ge.s32.totalorder %v376, 0
    %vm393 = vcmp.ge.s32.totalorder %v377, 0
    %vm394 = vcmp.ge.s32.totalorder %v378, 0
    %vm395 = vcmp.ge.s32.totalorder %v379, 0
    %vm396 = vcmp.ge.s32.totalorder %v380, 0
    %vm397 = vcmp.ge.s32.totalorder %v381, 0
    %vm398 = vcmp.ge.s32.totalorder %v382, 0
    %vm399 = vcmp.ge.s32.totalorder %v383, 0
    %vm400 = vcmp.ge.s32.totalorder %v384, 0
    %vm401 = vcmp.ge.s32.totalorder %v385, 0
    %vm402 = vcmp.ge.s32.totalorder %v386, 0
    %vm403 = vcmp.ge.s32.totalorder %v387, 0
    %vm404 = vcmp.ge.s32.totalorder %v388, 0
    %vm405 = vcmp.ge.s32.totalorder %v389, 0
    %vm406 = vcmp.ge.s32.totalorder %v390, 0
    %vm407 = vcmp.lt.s32.totalorder %v375, 16
    %vm408 = vcmp.lt.s32.totalorder %v376, 16
    %vm409 = vcmp.lt.s32.totalorder %v377, 16
    %vm410 = vcmp.lt.s32.totalorder %v378, 16
    %vm411 = vcmp.lt.s32.totalorder %v379, 16
    %vm412 = vcmp.lt.s32.totalorder %v380, 16
    %vm413 = vcmp.lt.s32.totalorder %v381, 16
    %vm414 = vcmp.lt.s32.totalorder %v382, 16
    %vm415 = vcmp.lt.s32.totalorder %v383, 16
    %vm416 = vcmp.lt.s32.totalorder %v384, 16
    %vm417 = vcmp.lt.s32.totalorder %v385, 16
    %vm418 = vcmp.lt.s32.totalorder %v386, 16
    %vm419 = vcmp.lt.s32.totalorder %v387, 16
    %vm420 = vcmp.lt.s32.totalorder %v388, 16
    %vm421 = vcmp.lt.s32.totalorder %v389, 16
    %vm422 = vcmp.lt.s32.totalorder %v390, 16
    %vm423 = vmand %vm391, %vm407
    %vm424 = vmand %vm392, %vm408
    %vm425 = vmand %vm393, %vm409
    %vm426 = vmand %vm394, %vm410
    %vm427 = vmand %vm395, %vm411
    %vm428 = vmand %vm396, %vm412
    %vm429 = vmand %vm397, %vm413
    %vm430 = vmand %vm398, %vm414
    %vm431 = vmand %vm399, %vm415
    %vm432 = vmand %vm400, %vm416
    %vm433 = vmand %vm401, %vm417
    %vm434 = vmand %vm402, %vm418
    %vm435 = vmand %vm403, %vm419
    %vm436 = vmand %vm404, %vm420
    %vm437 = vmand %vm405, %vm421
    %vm438 = vmand %vm406, %vm422
    %v439 = vadd.s32 %v231, 2
    %v440 = vadd.s32 %v232, 2
    %v441 = vadd.s32 %v233, 2
    %v442 = vadd.s32 %v234, 2
    %v443 = vadd.s32 %v235, 2
    %v444 = vadd.s32 %v236, 2
    %v445 = vadd.s32 %v237, 2
    %v446 = vadd.s32 %v238, 2
    %v447 = vadd.s32 %v239, 2
    %v448 = vadd.s32 %v240, 2
    %v449 = vadd.s32 %v241, 2
    %v450 = vadd.s32 %v242, 2
    %v451 = vadd.s32 %v243, 2
    %v452 = vadd.s32 %v244, 2
    %v453 = vadd.s32 %v245, 2
    %v454 = vadd.s32 %v246, 2
    %vm455 = vcmp.ge.s32.totalorder %v439, 0
    %vm456 = vcmp.ge.s32.totalorder %v440, 0
    %vm457 = vcmp.ge.s32.totalorder %v441, 0
    %vm458 = vcmp.ge.s32.totalorder %v442, 0
    %vm459 = vcmp.ge.s32.totalorder %v443, 0
    %vm460 = vcmp.ge.s32.totalorder %v444, 0
    %vm461 = vcmp.ge.s32.totalorder %v445, 0
    %vm462 = vcmp.ge.s32.totalorder %v446, 0
    %vm463 = vcmp.ge.s32.totalorder %v447, 0
    %vm464 = vcmp.ge.s32.totalorder %v448, 0
    %vm465 = vcmp.ge.s32.totalorder %v449, 0
    %vm466 = vcmp.ge.s32.totalorder %v450, 0
    %vm467 = vcmp.ge.s32.totalorder %v451, 0
    %vm468 = vcmp.ge.s32.totalorder %v452, 0
    %vm469 = vcmp.ge.s32.totalorder %v453, 0
    %vm470 = vcmp.ge.s32.totalorder %v454, 0
    %vm471 = vcmp.lt.s32.totalorder %v439, 16
    %vm472 = vcmp.lt.s32.totalorder %v440, 16
    %vm473 = vcmp.lt.s32.totalorder %v441, 16
    %vm474 = vcmp.lt.s32.totalorder %v442, 16
    %vm475 = vcmp.lt.s32.totalorder %v443, 16
    %vm476 = vcmp.lt.s32.totalorder %v444, 16
    %vm477 = vcmp.lt.s32.totalorder %v445, 16
    %vm478 = vcmp.lt.s32.totalorder %v446, 16
    %vm479 = vcmp.lt.s32.totalorder %v447, 16
    %vm480 = vcmp.lt.s32.totalorder %v448, 16
    %vm481 = vcmp.lt.s32.totalorder %v449, 16
    %vm482 = vcmp.lt.s32.totalorder %v450, 16
    %vm483 = vcmp.lt.s32.totalorder %v451, 16
    %vm484 = vcmp.lt.s32.totalorder %v452, 16
    %vm485 = vcmp.lt.s32.totalorder %v453, 16
    %vm486 = vcmp.lt.s32.totalorder %v454, 16
    %vm487 = vmand %vm455, %vm471
    %vm488 = vmand %vm456, %vm472
    %vm489 = vmand %vm457, %vm473
    %vm490 = vmand %vm458, %vm474
    %vm491 = vmand %vm459, %vm475
    %vm492 = vmand %vm460, %vm476
    %vm493 = vmand %vm461, %vm477
    %vm494 = vmand %vm462, %vm478
    %vm495 = vmand %vm463, %vm479
    %vm496 = vmand %vm464, %vm480
    %vm497 = vmand %vm465, %vm481
    %vm498 = vmand %vm466, %vm482
    %vm499 = vmand %vm467, %vm483
    %vm500 = vmand %vm468, %vm484
    %vm501 = vmand %vm469, %vm485
    %vm502 = vmand %vm470, %vm486
    %v503 = vlaneseq
    %v504 = vand.u32 %v503, 127
    %v505 = vrot.slane %v22, 6
    %v506 = vrot.slane %v23, 6
    %v507 = vrot.slane %v24, 6
    %v508 = vrot.slane %v25, 6
    %v509 = vrot.slane %v26, 6
    %v510 = vrot.slane %v27, 6
    %v511 = vrot.slane %v28, 6
    %v512 = vrot.slane %v29, 6
    %v513 = vrot.slane %v30, 6
    %v514 = vrot.slane %v31, 6
    %v515 = vrot.slane %v32, 6
    %v516 = vrot.slane %v33, 6
    %v517 = vrot.slane %v34, 6
    %v518 = vrot.slane %v35, 6
    %v519 = vrot.slane %v36, 6
    %v520 = vrot.slane %v37, 6
    %vm521 = vcmp.lt.s32.totalorder %v39, 2
    %v522 = vsel %vm521, %v519, %v520
    %v523 = vsel %vm521, %v518, %v519
    %v524 = vsel %vm521, %v517, %v518
    %v525 = vsel %vm521, %v516, %v517
    %v526 = vsel %vm521, %v515, %v516
    %v527 = vsel %vm521, %v514, %v515
    %v528 = vsel %vm521, %v513, %v514
    %v529 = vsel %vm521, %v512, %v513
    %v530 = vsel %vm521, %v511, %v512
    %v531 = vsel %vm521, %v510, %v511
    %v532 = vsel %vm521, %v509, %v510
    %v533 = vsel %vm521, %v508, %v509
    %v534 = vsel %vm521, %v507, %v508
    %v535 = vsel %vm521, %v506, %v507
    %v536 = vsel %vm521, %v505, %v506
    %v537 = vsel %vm521, %v520, %v505
    %538 = vset.pattern.permute.xlu0 0
    %539 = vperm.xlu0 %538, %v537
    %v540 = vpop.permute.xlu0 %539
    %541 = vset.pattern.permute.xlu0 0
    %542 = vperm.xlu0 %541, %v536
    %v543 = vpop.permute.xlu0 %542
    %544 = vset.pattern.permute.xlu0 0
    %545 = vperm.xlu0 %544, %v535
    %v546 = vpop.permute.xlu0 %545
    %547 = vset.pattern.permute.xlu0 0
    %548 = vperm.xlu0 %547, %v534
    %v549 = vpop.permute.xlu0 %548
    %550 = vset.pattern.permute.xlu0 0
    %551 = vperm.xlu0 %550, %v533
    %v552 = vpop.permute.xlu0 %551
    %553 = vset.pattern.permute.xlu0 0
    %554 = vperm.xlu0 %553, %v532
    %v555 = vpop.permute.xlu0 %554
    %556 = vset.pattern.permute.xlu0 0
    %557 = vperm.xlu0 %556, %v531
    %v558 = vpop.permute.xlu0 %557
    %559 = vset.pattern.permute.xlu0 0
    %560 = vperm.xlu0 %559, %v530
    %v561 = vpop.permute.xlu0 %560
    %562 = vset.pattern.permute.xlu0 0
    %563 = vperm.xlu0 %562, %v529
    %v564 = vpop.permute.xlu0 %563
    %565 = vset.pattern.permute.xlu0 0
    %566 = vperm.xlu0 %565, %v528
    %v567 = vpop.permute.xlu0 %566
    %568 = vset.pattern.permute.xlu0 0
    %569 = vperm.xlu0 %568, %v527
    %v570 = vpop.permute.xlu0 %569
    %571 = vset.pattern.permute.xlu0 0
    %572 = vperm.xlu0 %571, %v526
    %v573 = vpop.permute.xlu0 %572
    %574 = vset.pattern.permute.xlu0 0
    %575 = vperm.xlu0 %574, %v525
    %v576 = vpop.permute.xlu0 %575
    %577 = vset.pattern.permute.xlu0 0
    %578 = vperm.xlu0 %577, %v524
    %v579 = vpop.permute.xlu0 %578
    %580 = vset.pattern.permute.xlu0 0
    %581 = vperm.xlu0 %580, %v523
    %v582 = vpop.permute.xlu0 %581
    %583 = vset.pattern.permute.xlu0 0
    %584 = vperm.xlu0 %583, %v522
    %v585 = vpop.permute.xlu0 %584
    %vm586 = vcmp.eq.s32.totalorder %v504, %v540
    %vm587 = vcmp.eq.s32.totalorder %v504, %v543
    %vm588 = vcmp.eq.s32.totalorder %v504, %v546
    %vm589 = vcmp.eq.s32.totalorder %v504, %v549
    %vm590 = vcmp.eq.s32.totalorder %v504, %v552
    %vm591 = vcmp.eq.s32.totalorder %v504, %v555
    %vm592 = vcmp.eq.s32.totalorder %v504, %v558
    %vm593 = vcmp.eq.s32.totalorder %v504, %v561
    %vm594 = vcmp.eq.s32.totalorder %v504, %v564
    %vm595 = vcmp.eq.s32.totalorder %v504, %v567
    %vm596 = vcmp.eq.s32.totalorder %v504, %v570
    %vm597 = vcmp.eq.s32.totalorder %v504, %v573
    %vm598 = vcmp.eq.s32.totalorder %v504, %v576
    %vm599 = vcmp.eq.s32.totalorder %v504, %v579
    %vm600 = vcmp.eq.s32.totalorder %v504, %v582
    %vm601 = vcmp.eq.s32.totalorder %v504, %v585
    %v602 = vsel %vm295, 1, 0
    %v603 = vsel %vm296, 1, 0
    %v604 = vsel %vm297, 1, 0
    %v605 = vsel %vm298, 1, 0
    %v606 = vsel %vm299, 1, 0
    %v607 = vsel %vm300, 1, 0
    %v608 = vsel %vm301, 1, 0
    %v609 = vsel %vm302, 1, 0
    %v610 = vsel %vm303, 1, 0
    %v611 = vsel %vm304, 1, 0
    %v612 = vsel %vm305, 1, 0
    %v613 = vsel %vm306, 1, 0
    %v614 = vsel %vm307, 1, 0
    %v615 = vsel %vm308, 1, 0
    %v616 = vsel %vm309, 1, 0
    %v617 = vsel %vm310, 1, 0
    %vm618 = vcmp.eq.s32.totalorder %v602, 1
    %vm619 = vcmp.eq.s32.totalorder %v603, 1
    %vm620 = vcmp.eq.s32.totalorder %v604, 1
    %vm621 = vcmp.eq.s32.totalorder %v605, 1
    %vm622 = vcmp.eq.s32.totalorder %v606, 1
    %vm623 = vcmp.eq.s32.totalorder %v607, 1
    %vm624 = vcmp.eq.s32.totalorder %v608, 1
    %vm625 = vcmp.eq.s32.totalorder %v609, 1
    %vm626 = vcmp.eq.s32.totalorder %v610, 1
    %vm627 = vcmp.eq.s32.totalorder %v611, 1
    %vm628 = vcmp.eq.s32.totalorder %v612, 1
    %vm629 = vcmp.eq.s32.totalorder %v613, 1
    %vm630 = vcmp.eq.s32.totalorder %v614, 1
    %vm631 = vcmp.eq.s32.totalorder %v615, 1
    %vm632 = vcmp.eq.s32.totalorder %v616, 1
    %vm633 = vcmp.eq.s32.totalorder %v617, 1
    %vm634 = vmand %vm586, %vm618
    %vm635 = vmand %vm587, %vm619
    %vm636 = vmand %vm588, %vm620
    %vm637 = vmand %vm589, %vm621
    %vm638 = vmand %vm590, %vm622
    %vm639 = vmand %vm591, %vm623
    %vm640 = vmand %vm592, %vm624
    %vm641 = vmand %vm593, %vm625
    %vm642 = vmand %vm594, %vm626
    %vm643 = vmand %vm595, %vm627
    %vm644 = vmand %vm596, %vm628
    %vm645 = vmand %vm597, %vm629
    %vm646 = vmand %vm598, %vm630
    %vm647 = vmand %vm599, %vm631
    %vm648 = vmand %vm600, %vm632
    %vm649 = vmand %vm601, %vm633
    %v650 = vrot.slane %v22, 7
    %v651 = vrot.slane %v23, 7
    %v652 = vrot.slane %v24, 7
    %v653 = vrot.slane %v25, 7
    %v654 = vrot.slane %v26, 7
    %v655 = vrot.slane %v27, 7
    %v656 = vrot.slane %v28, 7
    %v657 = vrot.slane %v29, 7
    %v658 = vrot.slane %v30, 7
    %v659 = vrot.slane %v31, 7
    %v660 = vrot.slane %v32, 7
    %v661 = vrot.slane %v33, 7
    %v662 = vrot.slane %v34, 7
    %v663 = vrot.slane %v35, 7
    %v664 = vrot.slane %v36, 7
    %v665 = vrot.slane %v37, 7
    %vm666 = vcmp.lt.s32.totalorder %v39, 1
    %v667 = vsel %vm666, %v664, %v665
    %v668 = vsel %vm666, %v663, %v664
    %v669 = vsel %vm666, %v662, %v663
    %v670 = vsel %vm666, %v661, %v662
    %v671 = vsel %vm666, %v660, %v661
    %v672 = vsel %vm666, %v659, %v660
    %v673 = vsel %vm666, %v658, %v659
    %v674 = vsel %vm666, %v657, %v658
    %v675 = vsel %vm666, %v656, %v657
    %v676 = vsel %vm666, %v655, %v656
    %v677 = vsel %vm666, %v654, %v655
    %v678 = vsel %vm666, %v653, %v654
    %v679 = vsel %vm666, %v652, %v653
    %v680 = vsel %vm666, %v651, %v652
    %v681 = vsel %vm666, %v650, %v651
    %v682 = vsel %vm666, %v665, %v650
    %v683 = vadd.s32 %v682, 5
    %v684 = vadd.s32 %v681, 5
    %v685 = vadd.s32 %v680, 5
    %v686 = vadd.s32 %v679, 5
    %v687 = vadd.s32 %v678, 5
    %v688 = vadd.s32 %v677, 5
    %v689 = vadd.s32 %v676, 5
    %v690 = vadd.s32 %v675, 5
    %v691 = vadd.s32 %v674, 5
    %v692 = vadd.s32 %v673, 5
    %v693 = vadd.s32 %v672, 5
    %v694 = vadd.s32 %v671, 5
    %v695 = vadd.s32 %v670, 5
    %v696 = vadd.s32 %v669, 5
    %v697 = vadd.s32 %v668, 5
    %v698 = vadd.s32 %v667, 5
    %699 = vset.pattern.permute.xlu0 0
    %700 = vperm.xlu0 %699, %v683
    %v701 = vpop.permute.xlu0 %700
    %702 = vset.pattern.permute.xlu0 0
    %703 = vperm.xlu0 %702, %v684
    %v704 = vpop.permute.xlu0 %703
    %705 = vset.pattern.permute.xlu0 0
    %706 = vperm.xlu0 %705, %v685
    %v707 = vpop.permute.xlu0 %706
    %708 = vset.pattern.permute.xlu0 0
    %709 = vperm.xlu0 %708, %v686
    %v710 = vpop.permute.xlu0 %709
    %711 = vset.pattern.permute.xlu0 0
    %712 = vperm.xlu0 %711, %v687
    %v713 = vpop.permute.xlu0 %712
    %714 = vset.pattern.permute.xlu0 0
    %715 = vperm.xlu0 %714, %v688
    %v716 = vpop.permute.xlu0 %715
    %717 = vset.pattern.permute.xlu0 0
    %718 = vperm.xlu0 %717, %v689
    %v719 = vpop.permute.xlu0 %718
    %720 = vset.pattern.permute.xlu0 0
    %721 = vperm.xlu0 %720, %v690
    %v722 = vpop.permute.xlu0 %721
    %723 = vset.pattern.permute.xlu0 0
    %724 = vperm.xlu0 %723, %v691
    %v725 = vpop.permute.xlu0 %724
    %726 = vset.pattern.permute.xlu0 0
    %727 = vperm.xlu0 %726, %v692
    %v728 = vpop.permute.xlu0 %727
    %729 = vset.pattern.permute.xlu0 0
    %730 = vperm.xlu0 %729, %v693
    %v731 = vpop.permute.xlu0 %730
    %732 = vset.pattern.permute.xlu0 0
    %733 = vperm.xlu0 %732, %v694
    %v734 = vpop.permute.xlu0 %733
    %735 = vset.pattern.permute.xlu0 0
    %736 = vperm.xlu0 %735, %v695
    %v737 = vpop.permute.xlu0 %736
    %738 = vset.pattern.permute.xlu0 0
    %739 = vperm.xlu0 %738, %v696
    %v740 = vpop.permute.xlu0 %739
    %741 = vset.pattern.permute.xlu0 0
    %742 = vperm.xlu0 %741, %v697
    %v743 = vpop.permute.xlu0 %742
    %744 = vset.pattern.permute.xlu0 0
    %745 = vperm.xlu0 %744, %v698
    %v746 = vpop.permute.xlu0 %745
    %vm747 = vcmp.eq.s32.totalorder %v504, %v701
    %vm748 = vcmp.eq.s32.totalorder %v504, %v704
    %vm749 = vcmp.eq.s32.totalorder %v504, %v707
    %vm750 = vcmp.eq.s32.totalorder %v504, %v710
    %vm751 = vcmp.eq.s32.totalorder %v504, %v713
    %vm752 = vcmp.eq.s32.totalorder %v504, %v716
    %vm753 = vcmp.eq.s32.totalorder %v504, %v719
    %vm754 = vcmp.eq.s32.totalorder %v504, %v722
    %vm755 = vcmp.eq.s32.totalorder %v504, %v725
    %vm756 = vcmp.eq.s32.totalorder %v504, %v728
    %vm757 = vcmp.eq.s32.totalorder %v504, %v731
    %vm758 = vcmp.eq.s32.totalorder %v504, %v734
    %vm759 = vcmp.eq.s32.totalorder %v504, %v737
    %vm760 = vcmp.eq.s32.totalorder %v504, %v740
    %vm761 = vcmp.eq.s32.totalorder %v504, %v743
    %vm762 = vcmp.eq.s32.totalorder %v504, %v746
    %v763 = vsel %vm359, 1, 0
    %v764 = vsel %vm360, 1, 0
    %v765 = vsel %vm361, 1, 0
    %v766 = vsel %vm362, 1, 0
    %v767 = vsel %vm363, 1, 0
    %v768 = vsel %vm364, 1, 0
    %v769 = vsel %vm365, 1, 0
    %v770 = vsel %vm366, 1, 0
    %v771 = vsel %vm367, 1, 0
    %v772 = vsel %vm368, 1, 0
    %v773 = vsel %vm369, 1, 0
    %v774 = vsel %vm370, 1, 0
    %v775 = vsel %vm371, 1, 0
    %v776 = vsel %vm372, 1, 0
    %v777 = vsel %vm373, 1, 0
    %v778 = vsel %vm374, 1, 0
    %vm779 = vcmp.eq.s32.totalorder %v763, 1
    %vm780 = vcmp.eq.s32.totalorder %v764, 1
    %vm781 = vcmp.eq.s32.totalorder %v765, 1
    %vm782 = vcmp.eq.s32.totalorder %v766, 1
    %vm783 = vcmp.eq.s32.totalorder %v767, 1
    %vm784 = vcmp.eq.s32.totalorder %v768, 1
    %vm785 = vcmp.eq.s32.totalorder %v769, 1
    %vm786 = vcmp.eq.s32.totalorder %v770, 1
    %vm787 = vcmp.eq.s32.totalorder %v771, 1
    %vm788 = vcmp.eq.s32.totalorder %v772, 1
    %vm789 = vcmp.eq.s32.totalorder %v773, 1
    %vm790 = vcmp.eq.s32.totalorder %v774, 1
    %vm791 = vcmp.eq.s32.totalorder %v775, 1
    %vm792 = vcmp.eq.s32.totalorder %v776, 1
    %vm793 = vcmp.eq.s32.totalorder %v777, 1
    %vm794 = vcmp.eq.s32.totalorder %v778, 1
    %vm795 = vmand %vm747, %vm779
    %vm796 = vmand %vm748, %vm780
    %vm797 = vmand %vm749, %vm781
    %vm798 = vmand %vm750, %vm782
    %vm799 = vmand %vm751, %vm783
    %vm800 = vmand %vm752, %vm784
    %vm801 = vmand %vm753, %vm785
    %vm802 = vmand %vm754, %vm786
    %vm803 = vmand %vm755, %vm787
    %vm804 = vmand %vm756, %vm788
    %vm805 = vmand %vm757, %vm789
    %vm806 = vmand %vm758, %vm790
    %vm807 = vmand %vm759, %vm791
    %vm808 = vmand %vm760, %vm792
    %vm809 = vmand %vm761, %vm793
    %vm810 = vmand %vm762, %vm794
    %vm811 = vmor %vm634, %vm795
    %vm812 = vmor %vm635, %vm796
    %vm813 = vmor %vm636, %vm797
    %vm814 = vmor %vm637, %vm798
    %vm815 = vmor %vm638, %vm799
    %vm816 = vmor %vm639, %vm800
    %vm817 = vmor %vm640, %vm801
    %vm818 = vmor %vm641, %vm802
    %vm819 = vmor %vm642, %vm803
    %vm820 = vmor %vm643, %vm804
    %vm821 = vmor %vm644, %vm805
    %vm822 = vmor %vm645, %vm806
    %vm823 = vmor %vm646, %vm807
    %vm824 = vmor %vm647, %vm808
    %vm825 = vmor %vm648, %vm809
    %vm826 = vmor %vm649, %vm810
    %v827 = vadd.s32 %v22, 10
    %v828 = vadd.s32 %v23, 10
    %v829 = vadd.s32 %v24, 10
    %v830 = vadd.s32 %v25, 10
    %v831 = vadd.s32 %v26, 10
    %v832 = vadd.s32 %v27, 10
    %v833 = vadd.s32 %v28, 10
    %v834 = vadd.s32 %v29, 10
    %v835 = vadd.s32 %v30, 10
    %v836 = vadd.s32 %v31, 10
    %v837 = vadd.s32 %v32, 10
    %v838 = vadd.s32 %v33, 10
    %v839 = vadd.s32 %v34, 10
    %v840 = vadd.s32 %v35, 10
    %v841 = vadd.s32 %v36, 10
    %v842 = vadd.s32 %v37, 10
    %843 = vset.pattern.permute.xlu0 0
    %844 = vperm.xlu0 %843, %v827
    %v845 = vpop.permute.xlu0 %844
    %846 = vset.pattern.permute.xlu0 0
    %847 = vperm.xlu0 %846, %v828
    %v848 = vpop.permute.xlu0 %847
    %849 = vset.pattern.permute.xlu0 0
    %850 = vperm.xlu0 %849, %v829
    %v851 = vpop.permute.xlu0 %850
    %852 = vset.pattern.permute.xlu0 0
    %853 = vperm.xlu0 %852, %v830
    %v854 = vpop.permute.xlu0 %853
    %855 = vset.pattern.permute.xlu0 0
    %856 = vperm.xlu0 %855, %v831
    %v857 = vpop.permute.xlu0 %856
    %858 = vset.pattern.permute.xlu0 0
    %859 = vperm.xlu0 %858, %v832
    %v860 = vpop.permute.xlu0 %859
    %861 = vset.pattern.permute.xlu0 0
    %862 = vperm.xlu0 %861, %v833
    %v863 = vpop.permute.xlu0 %862
    %864 = vset.pattern.permute.xlu0 0
    %865 = vperm.xlu0 %864, %v834
    %v866 = vpop.permute.xlu0 %865
    %867 = vset.pattern.permute.xlu0 0
    %868 = vperm.xlu0 %867, %v835
    %v869 = vpop.permute.xlu0 %868
    %870 = vset.pattern.permute.xlu0 0
    %871 = vperm.xlu0 %870, %v836
    %v872 = vpop.permute.xlu0 %871
    %873 = vset.pattern.permute.xlu0 0
    %874 = vperm.xlu0 %873, %v837
    %v875 = vpop.permute.xlu0 %874
    %876 = vset.pattern.permute.xlu0 0
    %877 = vperm.xlu0 %876, %v838
    %v878 = vpop.permute.xlu0 %877
    %879 = vset.pattern.permute.xlu0 0
    %880 = vperm.xlu0 %879, %v839
    %v881 = vpop.permute.xlu0 %880
    %882 = vset.pattern.permute.xlu0 0
    %883 = vperm.xlu0 %882, %v840
    %v884 = vpop.permute.xlu0 %883
    %885 = vset.pattern.permute.xlu0 0
    %886 = vperm.xlu0 %885, %v841
    %v887 = vpop.permute.xlu0 %886
    %888 = vset.pattern.permute.xlu0 0
    %889 = vperm.xlu0 %888, %v842
    %v890 = vpop.permute.xlu0 %889
    %vm891 = vcmp.eq.s32.totalorder %v504, %v845
    %vm892 = vcmp.eq.s32.totalorder %v504, %v848
    %vm893 = vcmp.eq.s32.totalorder %v504, %v851
    %vm894 = vcmp.eq.s32.totalorder %v504, %v854
    %vm895 = vcmp.eq.s32.totalorder %v504, %v857
    %vm896 = vcmp.eq.s32.totalorder %v504, %v860
    %vm897 = vcmp.eq.s32.totalorder %v504, %v863
    %vm898 = vcmp.eq.s32.totalorder %v504, %v866
    %vm899 = vcmp.eq.s32.totalorder %v504, %v869
    %vm900 = vcmp.eq.s32.totalorder %v504, %v872
    %vm901 = vcmp.eq.s32.totalorder %v504, %v875
    %vm902 = vcmp.eq.s32.totalorder %v504, %v878
    %vm903 = vcmp.eq.s32.totalorder %v504, %v881
    %vm904 = vcmp.eq.s32.totalorder %v504, %v884
    %vm905 = vcmp.eq.s32.totalorder %v504, %v887
    %vm906 = vcmp.eq.s32.totalorder %v504, %v890
    %vm907 = vmor %vm811, %vm891
    %vm908 = vmor %vm812, %vm892
    %vm909 = vmor %vm813, %vm893
    %vm910 = vmor %vm814, %vm894
    %vm911 = vmor %vm815, %vm895
    %vm912 = vmor %vm816, %vm896
    %vm913 = vmor %vm817, %vm897
    %vm914 = vmor %vm818, %vm898
    %vm915 = vmor %vm819, %vm899
    %vm916 = vmor %vm820, %vm900
    %vm917 = vmor %vm821, %vm901
    %vm918 = vmor %vm822, %vm902
    %vm919 = vmor %vm823, %vm903
    %vm920 = vmor %vm824, %vm904
    %vm921 = vmor %vm825, %vm905
    %vm922 = vmor %vm826, %vm906
    %v923 = vrot.slane %v22, 1
    %v924 = vrot.slane %v23, 1
    %v925 = vrot.slane %v24, 1
    %v926 = vrot.slane %v25, 1
    %v927 = vrot.slane %v26, 1
    %v928 = vrot.slane %v27, 1
    %v929 = vrot.slane %v28, 1
    %v930 = vrot.slane %v29, 1
    %v931 = vrot.slane %v30, 1
    %v932 = vrot.slane %v31, 1
    %v933 = vrot.slane %v32, 1
    %v934 = vrot.slane %v33, 1
    %v935 = vrot.slane %v34, 1
    %v936 = vrot.slane %v35, 1
    %v937 = vrot.slane %v36, 1
    %v938 = vrot.slane %v37, 1
    %vm939 = vcmp.lt.s32.totalorder %v39, 7
    %v940 = vsel %vm939, %v937, %v938
    %v941 = vsel %vm939, %v936, %v937
    %v942 = vsel %vm939, %v935, %v936
    %v943 = vsel %vm939, %v934, %v935
    %v944 = vsel %vm939, %v933, %v934
    %v945 = vsel %vm939, %v932, %v933
    %v946 = vsel %vm939, %v931, %v932
    %v947 = vsel %vm939, %v930, %v931
    %v948 = vsel %vm939, %v929, %v930
    %v949 = vsel %vm939, %v928, %v929
    %v950 = vsel %vm939, %v927, %v928
    %v951 = vsel %vm939, %v926, %v927
    %v952 = vsel %vm939, %v925, %v926
    %v953 = vsel %vm939, %v924, %v925
    %v954 = vsel %vm939, %v923, %v924
    %v955 = vsel %vm939, %v938, %v923
    %v956 = vadd.s32 %v954, 15
    %v957 = vadd.s32 %v953, 15
    %v958 = vadd.s32 %v952, 15
    %v959 = vadd.s32 %v951, 15
    %v960 = vadd.s32 %v950, 15
    %v961 = vadd.s32 %v949, 15
    %v962 = vadd.s32 %v948, 15
    %v963 = vadd.s32 %v947, 15
    %v964 = vadd.s32 %v946, 15
    %v965 = vadd.s32 %v945, 15
    %v966 = vadd.s32 %v944, 15
    %v967 = vadd.s32 %v943, 15
    %v968 = vadd.s32 %v942, 15
    %v969 = vadd.s32 %v941, 15
    %v970 = vadd.s32 %v940, 15
    %v971 = vadd.s32 %v955, 15
    %972 = vset.pattern.permute.xlu0 0
    %973 = vperm.xlu0 %972, %v956
    %v974 = vpop.permute.xlu0 %973
    %975 = vset.pattern.permute.xlu0 0
    %976 = vperm.xlu0 %975, %v957
    %v977 = vpop.permute.xlu0 %976
    %978 = vset.pattern.permute.xlu0 0
    %979 = vperm.xlu0 %978, %v958
    %v980 = vpop.permute.xlu0 %979
    %981 = vset.pattern.permute.xlu0 0
    %982 = vperm.xlu0 %981, %v959
    %v983 = vpop.permute.xlu0 %982
    %984 = vset.pattern.permute.xlu0 0
    %985 = vperm.xlu0 %984, %v960
    %v986 = vpop.permute.xlu0 %985
    %987 = vset.pattern.permute.xlu0 0
    %988 = vperm.xlu0 %987, %v961
    %v989 = vpop.permute.xlu0 %988
    %990 = vset.pattern.permute.xlu0 0
    %991 = vperm.xlu0 %990, %v962
    %v992 = vpop.permute.xlu0 %991
    %993 = vset.pattern.permute.xlu0 0
    %994 = vperm.xlu0 %993, %v963
    %v995 = vpop.permute.xlu0 %994
    %996 = vset.pattern.permute.xlu0 0
    %997 = vperm.xlu0 %996, %v964
    %v998 = vpop.permute.xlu0 %997
    %999 = vset.pattern.permute.xlu0 0
    %1000 = vperm.xlu0 %999, %v965
    %v1001 = vpop.permute.xlu0 %1000
    %1002 = vset.pattern.permute.xlu0 0
    %1003 = vperm.xlu0 %1002, %v966
    %v1004 = vpop.permute.xlu0 %1003
    %1005 = vset.pattern.permute.xlu0 0
    %1006 = vperm.xlu0 %1005, %v967
    %v1007 = vpop.permute.xlu0 %1006
    %1008 = vset.pattern.permute.xlu0 0
    %1009 = vperm.xlu0 %1008, %v968
    %v1010 = vpop.permute.xlu0 %1009
    %1011 = vset.pattern.permute.xlu0 0
    %1012 = vperm.xlu0 %1011, %v969
    %v1013 = vpop.permute.xlu0 %1012
    %1014 = vset.pattern.permute.xlu0 0
    %1015 = vperm.xlu0 %1014, %v970
    %v1016 = vpop.permute.xlu0 %1015
    %1017 = vset.pattern.permute.xlu0 0
    %1018 = vperm.xlu0 %1017, %v971
    %v1019 = vpop.permute.xlu0 %1018
    %vm1020 = vcmp.eq.s32.totalorder %v504, %v974
    %vm1021 = vcmp.eq.s32.totalorder %v504, %v977
    %vm1022 = vcmp.eq.s32.totalorder %v504, %v980
    %vm1023 = vcmp.eq.s32.totalorder %v504, %v983
    %vm1024 = vcmp.eq.s32.totalorder %v504, %v986
    %vm1025 = vcmp.eq.s32.totalorder %v504, %v989
    %vm1026 = vcmp.eq.s32.totalorder %v504, %v992
    %vm1027 = vcmp.eq.s32.totalorder %v504, %v995
    %vm1028 = vcmp.eq.s32.totalorder %v504, %v998
    %vm1029 = vcmp.eq.s32.totalorder %v504, %v1001
    %vm1030 = vcmp.eq.s32.totalorder %v504, %v1004
    %vm1031 = vcmp.eq.s32.totalorder %v504, %v1007
    %vm1032 = vcmp.eq.s32.totalorder %v504, %v1010
    %vm1033 = vcmp.eq.s32.totalorder %v504, %v1013
    %vm1034 = vcmp.eq.s32.totalorder %v504, %v1016
    %vm1035 = vcmp.eq.s32.totalorder %v504, %v1019
    %v1036 = vsel %vm423, 1, 0
    %v1037 = vsel %vm424, 1, 0
    %v1038 = vsel %vm425, 1, 0
    %v1039 = vsel %vm426, 1, 0
    %v1040 = vsel %vm427, 1, 0
    %v1041 = vsel %vm428, 1, 0
    %v1042 = vsel %vm429, 1, 0
    %v1043 = vsel %vm430, 1, 0
    %v1044 = vsel %vm431, 1, 0
    %v1045 = vsel %vm432, 1, 0
    %v1046 = vsel %vm433, 1, 0
    %v1047 = vsel %vm434, 1, 0
    %v1048 = vsel %vm435, 1, 0
    %v1049 = vsel %vm436, 1, 0
    %v1050 = vsel %vm437, 1, 0
    %v1051 = vsel %vm438, 1, 0
    %vm1052 = vcmp.eq.s32.totalorder %v1036, 1
    %vm1053 = vcmp.eq.s32.totalorder %v1037, 1
    %vm1054 = vcmp.eq.s32.totalorder %v1038, 1
    %vm1055 = vcmp.eq.s32.totalorder %v1039, 1
    %vm1056 = vcmp.eq.s32.totalorder %v1040, 1
    %vm1057 = vcmp.eq.s32.totalorder %v1041, 1
    %vm1058 = vcmp.eq.s32.totalorder %v1042, 1
    %vm1059 = vcmp.eq.s32.totalorder %v1043, 1
    %vm1060 = vcmp.eq.s32.totalorder %v1044, 1
    %vm1061 = vcmp.eq.s32.totalorder %v1045, 1
    %vm1062 = vcmp.eq.s32.totalorder %v1046, 1
    %vm1063 = vcmp.eq.s32.totalorder %v1047, 1
    %vm1064 = vcmp.eq.s32.totalorder %v1048, 1
    %vm1065 = vcmp.eq.s32.totalorder %v1049, 1
    %vm1066 = vcmp.eq.s32.totalorder %v1050, 1
    %vm1067 = vcmp.eq.s32.totalorder %v1051, 1
    %vm1068 = vmand %vm1020, %vm1052
    %vm1069 = vmand %vm1021, %vm1053
    %vm1070 = vmand %vm1022, %vm1054
    %vm1071 = vmand %vm1023, %vm1055
    %vm1072 = vmand %vm1024, %vm1056
    %vm1073 = vmand %vm1025, %vm1057
    %vm1074 = vmand %vm1026, %vm1058
    %vm1075 = vmand %vm1027, %vm1059
    %vm1076 = vmand %vm1028, %vm1060
    %vm1077 = vmand %vm1029, %vm1061
    %vm1078 = vmand %vm1030, %vm1062
    %vm1079 = vmand %vm1031, %vm1063
    %vm1080 = vmand %vm1032, %vm1064
    %vm1081 = vmand %vm1033, %vm1065
    %vm1082 = vmand %vm1034, %vm1066
    %vm1083 = vmand %vm1035, %vm1067
    %vm1084 = vmor %vm907, %vm1068
    %vm1085 = vmor %vm908, %vm1069
    %vm1086 = vmor %vm909, %vm1070
    %vm1087 = vmor %vm910, %vm1071
    %vm1088 = vmor %vm911, %vm1072
    %vm1089 = vmor %vm912, %vm1073
    %vm1090 = vmor %vm913, %vm1074
    %vm1091 = vmor %vm914, %vm1075
    %vm1092 = vmor %vm915, %vm1076
    %vm1093 = vmor %vm916, %vm1077
    %vm1094 = vmor %vm917, %vm1078
    %vm1095 = vmor %vm918, %vm1079
    %vm1096 = vmor %vm919, %vm1080
    %vm1097 = vmor %vm920, %vm1081
    %vm1098 = vmor %vm921, %vm1082
    %vm1099 = vmor %vm922, %vm1083
    %v1100 = vrot.slane %v22, 2
    %v1101 = vrot.slane %v23, 2
    %v1102 = vrot.slane %v24, 2
    %v1103 = vrot.slane %v25, 2
    %v1104 = vrot.slane %v26, 2
    %v1105 = vrot.slane %v27, 2
    %v1106 = vrot.slane %v28, 2
    %v1107 = vrot.slane %v29, 2
    %v1108 = vrot.slane %v30, 2
    %v1109 = vrot.slane %v31, 2
    %v1110 = vrot.slane %v32, 2
    %v1111 = vrot.slane %v33, 2
    %v1112 = vrot.slane %v34, 2
    %v1113 = vrot.slane %v35, 2
    %v1114 = vrot.slane %v36, 2
    %v1115 = vrot.slane %v37, 2
    %vm1116 = vcmp.lt.s32.totalorder %v39, 6
    %v1117 = vsel %vm1116, %v1114, %v1115
    %v1118 = vsel %vm1116, %v1113, %v1114
    %v1119 = vsel %vm1116, %v1112, %v1113
    %v1120 = vsel %vm1116, %v1111, %v1112
    %v1121 = vsel %vm1116, %v1110, %v1111
    %v1122 = vsel %vm1116, %v1109, %v1110
    %v1123 = vsel %vm1116, %v1108, %v1109
    %v1124 = vsel %vm1116, %v1107, %v1108
    %v1125 = vsel %vm1116, %v1106, %v1107
    %v1126 = vsel %vm1116, %v1105, %v1106
    %v1127 = vsel %vm1116, %v1104, %v1105
    %v1128 = vsel %vm1116, %v1103, %v1104
    %v1129 = vsel %vm1116, %v1102, %v1103
    %v1130 = vsel %vm1116, %v1101, %v1102
    %v1131 = vsel %vm1116, %v1100, %v1101
    %v1132 = vsel %vm1116, %v1115, %v1100
    %v1133 = vadd.s32 %v1131, 20
    %v1134 = vadd.s32 %v1130, 20
    %v1135 = vadd.s32 %v1129, 20
    %v1136 = vadd.s32 %v1128, 20
    %v1137 = vadd.s32 %v1127, 20
    %v1138 = vadd.s32 %v1126, 20
    %v1139 = vadd.s32 %v1125, 20
    %v1140 = vadd.s32 %v1124, 20
    %v1141 = vadd.s32 %v1123, 20
    %v1142 = vadd.s32 %v1122, 20
    %v1143 = vadd.s32 %v1121, 20
    %v1144 = vadd.s32 %v1120, 20
    %v1145 = vadd.s32 %v1119, 20
    %v1146 = vadd.s32 %v1118, 20
    %v1147 = vadd.s32 %v1117, 20
    %v1148 = vadd.s32 %v1132, 20
    %1149 = vset.pattern.permute.xlu0 0
    %1150 = vperm.xlu0 %1149, %v1133
    %v1151 = vpop.permute.xlu0 %1150
    %1152 = vset.pattern.permute.xlu0 0
    %1153 = vperm.xlu0 %1152, %v1134
    %v1154 = vpop.permute.xlu0 %1153
    %1155 = vset.pattern.permute.xlu0 0
    %1156 = vperm.xlu0 %1155, %v1135
    %v1157 = vpop.permute.xlu0 %1156
    %1158 = vset.pattern.permute.xlu0 0
    %1159 = vperm.xlu0 %1158, %v1136
    %v1160 = vpop.permute.xlu0 %1159
    %1161 = vset.pattern.permute.xlu0 0
    %1162 = vperm.xlu0 %1161, %v1137
    %v1163 = vpop.permute.xlu0 %1162
    %1164 = vset.pattern.permute.xlu0 0
    %1165 = vperm.xlu0 %1164, %v1138
    %v1166 = vpop.permute.xlu0 %1165
    %1167 = vset.pattern.permute.xlu0 0
    %1168 = vperm.xlu0 %1167, %v1139
    %v1169 = vpop.permute.xlu0 %1168
    %1170 = vset.pattern.permute.xlu0 0
    %1171 = vperm.xlu0 %1170, %v1140
    %v1172 = vpop.permute.xlu0 %1171
    %1173 = vset.pattern.permute.xlu0 0
    %1174 = vperm.xlu0 %1173, %v1141
    %v1175 = vpop.permute.xlu0 %1174
    %1176 = vset.pattern.permute.xlu0 0
    %1177 = vperm.xlu0 %1176, %v1142
    %v1178 = vpop.permute.xlu0 %1177
    %1179 = vset.pattern.permute.xlu0 0
    %1180 = vperm.xlu0 %1179, %v1143
    %v1181 = vpop.permute.xlu0 %1180
    %1182 = vset.pattern.permute.xlu0 0
    %1183 = vperm.xlu0 %1182, %v1144
    %v1184 = vpop.permute.xlu0 %1183
    %1185 = vset.pattern.permute.xlu0 0
    %1186 = vperm.xlu0 %1185, %v1145
    %v1187 = vpop.permute.xlu0 %1186
    %1188 = vset.pattern.permute.xlu0 0
    %1189 = vperm.xlu0 %1188, %v1146
    %v1190 = vpop.permute.xlu0 %1189
    %1191 = vset.pattern.permute.xlu0 0
    %1192 = vperm.xlu0 %1191, %v1147
    %v1193 = vpop.permute.xlu0 %1192
    %1194 = vset.pattern.permute.xlu0 0
    %1195 = vperm.xlu0 %1194, %v1148
    %v1196 = vpop.permute.xlu0 %1195
    %vm1197 = vcmp.eq.s32.totalorder %v504, %v1151
    %vm1198 = vcmp.eq.s32.totalorder %v504, %v1154
    %vm1199 = vcmp.eq.s32.totalorder %v504, %v1157
    %vm1200 = vcmp.eq.s32.totalorder %v504, %v1160
    %vm1201 = vcmp.eq.s32.totalorder %v504, %v1163
    %vm1202 = vcmp.eq.s32.totalorder %v504, %v1166
    %vm1203 = vcmp.eq.s32.totalorder %v504, %v1169
    %vm1204 = vcmp.eq.s32.totalorder %v504, %v1172
    %vm1205 = vcmp.eq.s32.totalorder %v504, %v1175
    %vm1206 = vcmp.eq.s32.totalorder %v504, %v1178
    %vm1207 = vcmp.eq.s32.totalorder %v504, %v1181
    %vm1208 = vcmp.eq.s32.totalorder %v504, %v1184
    %vm1209 = vcmp.eq.s32.totalorder %v504, %v1187
    %vm1210 = vcmp.eq.s32.totalorder %v504, %v1190
    %vm1211 = vcmp.eq.s32.totalorder %v504, %v1193
    %vm1212 = vcmp.eq.s32.totalorder %v504, %v1196
    %v1213 = vsel %vm487, 1, 0
    %v1214 = vsel %vm488, 1, 0
    %v1215 = vsel %vm489, 1, 0
    %v1216 = vsel %vm490, 1, 0
    %v1217 = vsel %vm491, 1, 0
    %v1218 = vsel %vm492, 1, 0
    %v1219 = vsel %vm493, 1, 0
    %v1220 = vsel %vm494, 1, 0
    %v1221 = vsel %vm495, 1, 0
    %v1222 = vsel %vm496, 1, 0
    %v1223 = vsel %vm497, 1, 0
    %v1224 = vsel %vm498, 1, 0
    %v1225 = vsel %vm499, 1, 0
    %v1226 = vsel %vm500, 1, 0
    %v1227 = vsel %vm501, 1, 0
    %v1228 = vsel %vm502, 1, 0
    %vm1229 = vcmp.eq.s32.totalorder %v1213, 1
    %vm1230 = vcmp.eq.s32.totalorder %v1214, 1
    %vm1231 = vcmp.eq.s32.totalorder %v1215, 1
    %vm1232 = vcmp.eq.s32.totalorder %v1216, 1
    %vm1233 = vcmp.eq.s32.totalorder %v1217, 1
    %vm1234 = vcmp.eq.s32.totalorder %v1218, 1
    %vm1235 = vcmp.eq.s32.totalorder %v1219, 1
    %vm1236 = vcmp.eq.s32.totalorder %v1220, 1
    %vm1237 = vcmp.eq.s32.totalorder %v1221, 1
    %vm1238 = vcmp.eq.s32.totalorder %v1222, 1
    %vm1239 = vcmp.eq.s32.totalorder %v1223, 1
    %vm1240 = vcmp.eq.s32.totalorder %v1224, 1
    %vm1241 = vcmp.eq.s32.totalorder %v1225, 1
    %vm1242 = vcmp.eq.s32.totalorder %v1226, 1
    %vm1243 = vcmp.eq.s32.totalorder %v1227, 1
    %vm1244 = vcmp.eq.s32.totalorder %v1228, 1
    %vm1245 = vmand %vm1197, %vm1229
    %vm1246 = vmand %vm1198, %vm1230
    %vm1247 = vmand %vm1199, %vm1231
    %vm1248 = vmand %vm1200, %vm1232
    %vm1249 = vmand %vm1201, %vm1233
    %vm1250 = vmand %vm1202, %vm1234
    %vm1251 = vmand %vm1203, %vm1235
    %vm1252 = vmand %vm1204, %vm1236
    %vm1253 = vmand %vm1205, %vm1237
    %vm1254 = vmand %vm1206, %vm1238
    %vm1255 = vmand %vm1207, %vm1239
    %vm1256 = vmand %vm1208, %vm1240
    %vm1257 = vmand %vm1209, %vm1241
    %vm1258 = vmand %vm1210, %vm1242
    %vm1259 = vmand %vm1211, %vm1243
    %vm1260 = vmand %vm1212, %vm1244
    %vm1261 = vmor %vm1084, %vm1245
    %vm1262 = vmor %vm1085, %vm1246
    %vm1263 = vmor %vm1086, %vm1247
    %vm1264 = vmor %vm1087, %vm1248
    %vm1265 = vmor %vm1088, %vm1249
    %vm1266 = vmor %vm1089, %vm1250
    %vm1267 = vmor %vm1090, %vm1251
    %vm1268 = vmor %vm1091, %vm1252
    %vm1269 = vmor %vm1092, %vm1253
    %vm1270 = vmor %vm1093, %vm1254
    %vm1271 = vmor %vm1094, %vm1255
    %vm1272 = vmor %vm1095, %vm1256
    %vm1273 = vmor %vm1096, %vm1257
    %vm1274 = vmor %vm1097, %vm1258
    %vm1275 = vmor %vm1098, %vm1259
    %vm1276 = vmor %vm1099, %vm1260
    %v1277 = vsel %vm1261, 1, 0
    %v1278 = vsel %vm1262, 1, 0
    %v1279 = vsel %vm1263, 1, 0
    %v1280 = vsel %vm1264, 1, 0
    %v1281 = vsel %vm1265, 1, 0
    %v1282 = vsel %vm1266, 1, 0
    %v1283 = vsel %vm1267, 1, 0
    %v1284 = vsel %vm1268, 1, 0
    %v1285 = vsel %vm1269, 1, 0
    %v1286 = vsel %vm1270, 1, 0
    %v1287 = vsel %vm1271, 1, 0
    %v1288 = vsel %vm1272, 1, 0
    %v1289 = vsel %vm1273, 1, 0
    %v1290 = vsel %vm1274, 1, 0
    %v1291 = vsel %vm1275, 1, 0
    %v1292 = vsel %vm1276, 1, 0
    %v1293 = vcvt.s32.f32 %v1277
    %v1294 = vcvt.s32.f32 %v1278
    %v1295 = vcvt.s32.f32 %v1279
    %v1296 = vcvt.s32.f32 %v1280
    %v1297 = vcvt.s32.f32 %v1281
    %v1298 = vcvt.s32.f32 %v1282
    %v1299 = vcvt.s32.f32 %v1283
    %v1300 = vcvt.s32.f32 %v1284
    %v1301 = vcvt.s32.f32 %v1285
    %v1302 = vcvt.s32.f32 %v1286
    %v1303 = vcvt.s32.f32 %v1287
    %v1304 = vcvt.s32.f32 %v1288
    %v1305 = vcvt.s32.f32 %v1289
    %v1306 = vcvt.s32.f32 %v1290
    %v1307 = vcvt.s32.f32 %v1291
    %v1308 = vcvt.s32.f32 %v1292
    %v1309 = vpack.c.bf16 %v1294, %v1293
    %v1310 = vpack.c.bf16 %v1296, %v1295
    %v1311 = vpack.c.bf16 %v1298, %v1297
    %v1312 = vpack.c.bf16 %v1300, %v1299
    %v1313 = vpack.c.bf16 %v1302, %v1301
    %v1314 = vpack.c.bf16 %v1304, %v1303
    %v1315 = vpack.c.bf16 %v1306, %v1305
    %v1316 = vpack.c.bf16 %v1308, %v1307
    %v1317 = vld [vmem:[%s1] sm:$0xf]
    %v1318 = vld [vmem:[%s1 + $0x4] sm:$0xf]
    %v1319 = vld [vmem:[%s1 + $0x8] sm:$0xf]
    %v1320 = vld [vmem:[%s1 + $0xc] sm:$0x1]
    %v1325 = vunpack.c.l.b16 %v1317
    %v1326 = vunpack.c.l.b16 %v1318
    %v1327 = vunpack.c.l.b16 %v1319
    %v1328 = vunpack.c.l.b16 %v1320
    %v1329 = vpack.c.b16 %v1326, %v1325
    %v1330 = vpack.c.b16 %v1328, %v1327
    %vm1332 = vcmask 203776
    %v1334 = vsel %vm1332, %v1309, 0
    %v1337 = vsel %vm1332, %v1310, 0
    %v1340 = vsel %vm1332, %v1311, 0
    %v1343 = vsel %vm1332, %v1312, 0
    %v1346 = vsel %vm1332, %v1313, 0
    %v1349 = vsel %vm1332, %v1314, 0
    %v1352 = vsel %vm1332, %v1315, 0
    %v1355 = vsel %vm1332, %v1316, 0
    %vm1357 = vcmask 1043456
    %vm1358 = vcmask 1044480
    %v1359 = vsel %vm1357, 4294967295, 65535
    %v1360 = vsel %vm1358, %v1359, 0
    %v1362 = vand.u32 %v1330, %v1360
    %1364 = vmatpush.bf16.msra.mxu0 0
    %1365 = vmatpush.bf16.msra.mxu0 0
    %1366 = vmatpush.bf16.msra.mxu0 0
    %1367 = vmatpush.bf16.msra.mxu0 0
    %1368 = vmatpush.bf16.msra.mxu0 0
    %1369 = vmatpush.bf16.msra.mxu0 0
    %1370 = vmatpush.bf16.msra.mxu0 %v1362
    %1371 = vmatpush.bf16.msra.mxu0 %v1329
    %1372 = vmatmul.bf16.gmra.mxu0 %v1334
    %v1373 = vpop.f32.mrf.mxu0
    %v1374 = vadd.f32 0.0, %v1373
    %v1375 = vpop.f32.mrf.mxu0
    %v1376 = vadd.f32 0.0, %v1375
    %1377 = vmatmul.bf16.gmra.mxu0 %v1337
    %v1378 = vpop.f32.mrf.mxu0
    %v1379 = vadd.f32 0.0, %v1378
    %v1380 = vpop.f32.mrf.mxu0
    %v1381 = vadd.f32 0.0, %v1380
    %1382 = vmatmul.bf16.gmra.mxu0 %v1340
    %v1383 = vpop.f32.mrf.mxu0
    %v1384 = vadd.f32 0.0, %v1383
    %v1385 = vpop.f32.mrf.mxu0
    %v1386 = vadd.f32 0.0, %v1385
    %1387 = vmatmul.bf16.gmra.mxu0 %v1343
    %v1388 = vpop.f32.mrf.mxu0
    %v1389 = vadd.f32 0.0, %v1388
    %v1390 = vpop.f32.mrf.mxu0
    %v1391 = vadd.f32 0.0, %v1390
    %1392 = vmatmul.bf16.gmra.mxu0 %v1346
    %v1393 = vpop.f32.mrf.mxu0
    %v1394 = vadd.f32 0.0, %v1393
    %v1395 = vpop.f32.mrf.mxu0
    %v1396 = vadd.f32 0.0, %v1395
    %1397 = vmatmul.bf16.gmra.mxu0 %v1349
    %v1398 = vpop.f32.mrf.mxu0
    %v1399 = vadd.f32 0.0, %v1398
    %v1400 = vpop.f32.mrf.mxu0
    %v1401 = vadd.f32 0.0, %v1400
    %1402 = vmatmul.bf16.gmra.mxu0 %v1352
    %v1403 = vpop.f32.mrf.mxu0
    %v1404 = vadd.f32 0.0, %v1403
    %v1405 = vpop.f32.mrf.mxu0
    %v1406 = vadd.f32 0.0, %v1405
    %1407 = vmatmul.bf16.gmra.mxu0 %v1355
    %v1408 = vpop.f32.mrf.mxu0
    %v1409 = vadd.f32 0.0, %v1408
    %v1410 = vpop.f32.mrf.mxu0
    %v1411 = vadd.f32 0.0, %v1410
    %1412 = vdwg.mxu0
    %v1413 = vmax.f32 %v1374, 0.0
    %v1414 = vmax.f32 %v1376, 0.0
    %v1415 = vmax.f32 %v1379, 0.0
    %v1416 = vmax.f32 %v1381, 0.0
    %v1417 = vmax.f32 %v1384, 0.0
    %v1418 = vmax.f32 %v1386, 0.0
    %v1419 = vmax.f32 %v1389, 0.0
    %v1420 = vmax.f32 %v1391, 0.0
    %v1421 = vmax.f32 %v1394, 0.0
    %v1422 = vmax.f32 %v1396, 0.0
    %v1423 = vmax.f32 %v1399, 0.0
    %v1424 = vmax.f32 %v1401, 0.0
    %v1425 = vmax.f32 %v1404, 0.0
    %v1426 = vmax.f32 %v1406, 0.0
    %v1427 = vmax.f32 %v1409, 0.0
    %v1428 = vmax.f32 %v1411, 0.0
    %v1429 = vrot.slane %v1413, 7
    %v1430 = vrot.slane %v1414, 7
    %v1431 = vrot.slane %v1415, 7
    %v1432 = vrot.slane %v1416, 7
    %v1433 = vrot.slane %v1417, 7
    %v1434 = vrot.slane %v1418, 7
    %v1435 = vrot.slane %v1419, 7
    %v1436 = vrot.slane %v1420, 7
    %v1437 = vrot.slane %v1421, 7
    %v1438 = vrot.slane %v1422, 7
    %v1439 = vrot.slane %v1423, 7
    %v1440 = vrot.slane %v1424, 7
    %v1441 = vrot.slane %v1425, 7
    %v1442 = vrot.slane %v1426, 7
    %v1443 = vrot.slane %v1427, 7
    %v1444 = vrot.slane %v1428, 7
    %v1445 = vsel %vm666, %v1443, %v1444
    %v1446 = vsel %vm666, %v1442, %v1443
    %v1447 = vsel %vm666, %v1441, %v1442
    %v1448 = vsel %vm666, %v1440, %v1441
    %v1449 = vsel %vm666, %v1439, %v1440
    %v1450 = vsel %vm666, %v1438, %v1439
    %v1451 = vsel %vm666, %v1437, %v1438
    %v1452 = vsel %vm666, %v1436, %v1437
    %v1453 = vsel %vm666, %v1435, %v1436
    %v1454 = vsel %vm666, %v1434, %v1435
    %v1455 = vsel %vm666, %v1433, %v1434
    %v1456 = vsel %vm666, %v1432, %v1433
    %v1457 = vsel %vm666, %v1431, %v1432
    %v1458 = vsel %vm666, %v1430, %v1431
    %v1459 = vsel %vm666, %v1429, %v1430
    %v1460 = vsel %vm666, %v1444, %v1429
    %v1461 = vsel %vm779, %v1460, 0.0
    %v1462 = vsel %vm780, %v1459, 0.0
    %v1463 = vsel %vm781, %v1458, 0.0
    %v1464 = vsel %vm782, %v1457, 0.0
    %v1465 = vsel %vm783, %v1456, 0.0
    %v1466 = vsel %vm784, %v1455, 0.0
    %v1467 = vsel %vm785, %v1454, 0.0
    %v1468 = vsel %vm786, %v1453, 0.0
    %v1469 = vsel %vm787, %v1452, 0.0
    %v1470 = vsel %vm788, %v1451, 0.0
    %v1471 = vsel %vm789, %v1450, 0.0
    %v1472 = vsel %vm790, %v1449, 0.0
    %v1473 = vsel %vm791, %v1448, 0.0
    %v1474 = vsel %vm792, %v1447, 0.0
    %v1475 = vsel %vm793, %v1446, 0.0
    %v1476 = vsel %vm794, %v1445, 0.0
    %v1477 = vpack.c.bf16 %v1462, %v1461
    %v1478 = vpack.c.bf16 %v1464, %v1463
    %v1479 = vpack.c.bf16 %v1466, %v1465
    %v1480 = vpack.c.bf16 %v1468, %v1467
    %v1481 = vpack.c.bf16 %v1470, %v1469
    %v1482 = vpack.c.bf16 %v1472, %v1471
    %v1483 = vpack.c.bf16 %v1474, %v1473
    %v1484 = vpack.c.bf16 %v1476, %v1475
    %v1485 = vld [vmem:[%s2] sm:$0xf]
    %v1486 = vld [vmem:[%s2 + $0x4] sm:$0xf]
    %v1487 = vld [vmem:[%s2 + $0x8] sm:$0xf]
    %v1488 = vld [vmem:[%s2 + $0xc] sm:$0xf]
    %v1489 = vpack.c.bf16 %v1414, %v1413
    %v1490 = vpack.c.bf16 %v1416, %v1415
    %v1491 = vpack.c.bf16 %v1418, %v1417
    %v1492 = vpack.c.bf16 %v1420, %v1419
    %v1493 = vpack.c.bf16 %v1422, %v1421
    %v1494 = vpack.c.bf16 %v1424, %v1423
    %v1495 = vpack.c.bf16 %v1426, %v1425
    %v1496 = vpack.c.bf16 %v1428, %v1427
    %s1497 = scalar_lea.vmem %s2, 16
    %v1498 = vld [vmem:[%s1497] sm:$0xf]
    %v1499 = vld [vmem:[%s1497 + $0x4] sm:$0xf]
    %v1500 = vld [vmem:[%s1497 + $0x8] sm:$0xf]
    %v1501 = vld [vmem:[%s1497 + $0xc] sm:$0xf]
    %v1506 = vunpack.c.l.b16 %v1498
    %v1507 = vunpack.c.l.b16 %v1499
    %v1508 = vunpack.c.l.b16 %v1500
    %v1509 = vunpack.c.l.b16 %v1501
    %v1510 = vpack.c.b16 %v1507, %v1506
    %v1511 = vpack.c.b16 %v1509, %v1508
    %vm1514 = vcmask 261120
    %v1516 = vsel %vm1514, %v1489, 0
    %v1519 = vsel %vm1514, %v1490, 0
    %v1522 = vsel %vm1514, %v1491, 0
    %v1525 = vsel %vm1514, %v1492, 0
    %v1528 = vsel %vm1514, %v1493, 0
    %v1531 = vsel %vm1514, %v1494, 0
    %v1534 = vsel %vm1514, %v1495, 0
    %v1537 = vsel %vm1514, %v1496, 0
    %1539 = vmatpush.bf16.msra.mxu0 0
    %1540 = vmatpush.bf16.msra.mxu0 0
    %1541 = vmatpush.bf16.msra.mxu0 0
    %1542 = vmatpush.bf16.msra.mxu0 0
    %1543 = vmatpush.bf16.msra.mxu0 0
    %1544 = vmatpush.bf16.msra.mxu0 0
    %1545 = vmatpush.bf16.msra.mxu0 %v1511
    %1546 = vmatpush.bf16.msra.mxu0 %v1510
    %1547 = vmatmul.bf16.gmra.mxu0 %v1516
    %v1548 = vpop.f32.mrf.mxu0
    %v1549 = vadd.f32 0.0, %v1548
    %v1550 = vpop.f32.mrf.mxu0
    %v1551 = vadd.f32 0.0, %v1550
    %1552 = vmatmul.bf16.gmra.mxu0 %v1519
    %v1553 = vpop.f32.mrf.mxu0
    %v1554 = vadd.f32 0.0, %v1553
    %v1555 = vpop.f32.mrf.mxu0
    %v1556 = vadd.f32 0.0, %v1555
    %1557 = vmatmul.bf16.gmra.mxu0 %v1522
    %v1558 = vpop.f32.mrf.mxu0
    %v1559 = vadd.f32 0.0, %v1558
    %v1560 = vpop.f32.mrf.mxu0
    %v1561 = vadd.f32 0.0, %v1560
    %1562 = vmatmul.bf16.gmra.mxu0 %v1525
    %v1563 = vpop.f32.mrf.mxu0
    %v1564 = vadd.f32 0.0, %v1563
    %v1565 = vpop.f32.mrf.mxu0
    %v1566 = vadd.f32 0.0, %v1565
    %1567 = vmatmul.bf16.gmra.mxu0 %v1528
    %v1568 = vpop.f32.mrf.mxu0
    %v1569 = vadd.f32 0.0, %v1568
    %v1570 = vpop.f32.mrf.mxu0
    %v1571 = vadd.f32 0.0, %v1570
    %1572 = vmatmul.bf16.gmra.mxu0 %v1531
    %v1573 = vpop.f32.mrf.mxu0
    %v1574 = vadd.f32 0.0, %v1573
    %v1575 = vpop.f32.mrf.mxu0
    %v1576 = vadd.f32 0.0, %v1575
    %1577 = vmatmul.bf16.gmra.mxu0 %v1534
    %v1578 = vpop.f32.mrf.mxu0
    %v1579 = vadd.f32 0.0, %v1578
    %v1580 = vpop.f32.mrf.mxu0
    %v1581 = vadd.f32 0.0, %v1580
    %1582 = vmatmul.bf16.gmra.mxu0 %v1537
    %v1583 = vpop.f32.mrf.mxu0
    %v1584 = vadd.f32 0.0, %v1583
    %v1585 = vpop.f32.mrf.mxu0
    %v1586 = vadd.f32 0.0, %v1585
    %1587 = vdwg.mxu0
    %v1592 = vunpack.c.l.b16 %v1485
    %v1593 = vunpack.c.l.b16 %v1486
    %v1594 = vunpack.c.l.b16 %v1487
    %v1595 = vunpack.c.l.b16 %v1488
    %v1596 = vpack.c.b16 %v1593, %v1592
    %v1597 = vpack.c.b16 %v1595, %v1594
    %v1601 = vsel %vm1514, %v1477, 0
    %v1604 = vsel %vm1514, %v1478, 0
    %v1607 = vsel %vm1514, %v1479, 0
    %v1610 = vsel %vm1514, %v1480, 0
    %v1613 = vsel %vm1514, %v1481, 0
    %v1616 = vsel %vm1514, %v1482, 0
    %v1619 = vsel %vm1514, %v1483, 0
    %v1622 = vsel %vm1514, %v1484, 0
    %1624 = vmatpush.bf16.msra.mxu0 0
    %1625 = vmatpush.bf16.msra.mxu0 0
    %1626 = vmatpush.bf16.msra.mxu0 0
    %1627 = vmatpush.bf16.msra.mxu0 0
    %1628 = vmatpush.bf16.msra.mxu0 0
    %1629 = vmatpush.bf16.msra.mxu0 0
    %1630 = vmatpush.bf16.msra.mxu0 %v1597
    %1631 = vmatpush.bf16.msra.mxu0 %v1596
    %1632 = vmatmul.bf16.gmra.mxu0 %v1601
    %v1633 = vpop.f32.mrf.mxu0
    %v1634 = vadd.f32 %v1549, %v1633
    %v1635 = vpop.f32.mrf.mxu0
    %v1636 = vadd.f32 %v1551, %v1635
    %1637 = vmatmul.bf16.gmra.mxu0 %v1604
    %v1638 = vpop.f32.mrf.mxu0
    %v1639 = vadd.f32 %v1554, %v1638
    %v1640 = vpop.f32.mrf.mxu0
    %v1641 = vadd.f32 %v1556, %v1640
    %1642 = vmatmul.bf16.gmra.mxu0 %v1607
    %v1643 = vpop.f32.mrf.mxu0
    %v1644 = vadd.f32 %v1559, %v1643
    %v1645 = vpop.f32.mrf.mxu0
    %v1646 = vadd.f32 %v1561, %v1645
    %1647 = vmatmul.bf16.gmra.mxu0 %v1610
    %v1648 = vpop.f32.mrf.mxu0
    %v1649 = vadd.f32 %v1564, %v1648
    %v1650 = vpop.f32.mrf.mxu0
    %v1651 = vadd.f32 %v1566, %v1650
    %1652 = vmatmul.bf16.gmra.mxu0 %v1613
    %v1653 = vpop.f32.mrf.mxu0
    %v1654 = vadd.f32 %v1569, %v1653
    %v1655 = vpop.f32.mrf.mxu0
    %v1656 = vadd.f32 %v1571, %v1655
    %1657 = vmatmul.bf16.gmra.mxu0 %v1616
    %v1658 = vpop.f32.mrf.mxu0
    %v1659 = vadd.f32 %v1574, %v1658
    %v1660 = vpop.f32.mrf.mxu0
    %v1661 = vadd.f32 %v1576, %v1660
    %1662 = vmatmul.bf16.gmra.mxu0 %v1619
    %v1663 = vpop.f32.mrf.mxu0
    %v1664 = vadd.f32 %v1579, %v1663
    %v1665 = vpop.f32.mrf.mxu0
    %v1666 = vadd.f32 %v1581, %v1665
    %1667 = vmatmul.bf16.gmra.mxu0 %v1622
    %v1668 = vpop.f32.mrf.mxu0
    %v1669 = vadd.f32 %v1584, %v1668
    %v1670 = vpop.f32.mrf.mxu0
    %v1671 = vadd.f32 %v1586, %v1670
    %1672 = vdwg.mxu0
    %v1673 = vrot.slane %v1413, 1
    %v1674 = vrot.slane %v1414, 1
    %v1675 = vrot.slane %v1415, 1
    %v1676 = vrot.slane %v1416, 1
    %v1677 = vrot.slane %v1417, 1
    %v1678 = vrot.slane %v1418, 1
    %v1679 = vrot.slane %v1419, 1
    %v1680 = vrot.slane %v1420, 1
    %v1681 = vrot.slane %v1421, 1
    %v1682 = vrot.slane %v1422, 1
    %v1683 = vrot.slane %v1423, 1
    %v1684 = vrot.slane %v1424, 1
    %v1685 = vrot.slane %v1425, 1
    %v1686 = vrot.slane %v1426, 1
    %v1687 = vrot.slane %v1427, 1
    %v1688 = vrot.slane %v1428, 1
    %v1689 = vsel %vm939, %v1687, %v1688
    %v1690 = vsel %vm939, %v1686, %v1687
    %v1691 = vsel %vm939, %v1685, %v1686
    %v1692 = vsel %vm939, %v1684, %v1685
    %v1693 = vsel %vm939, %v1683, %v1684
    %v1694 = vsel %vm939, %v1682, %v1683
    %v1695 = vsel %vm939, %v1681, %v1682
    %v1696 = vsel %vm939, %v1680, %v1681
    %v1697 = vsel %vm939, %v1679, %v1680
    %v1698 = vsel %vm939, %v1678, %v1679
    %v1699 = vsel %vm939, %v1677, %v1678
    %v1700 = vsel %vm939, %v1676, %v1677
    %v1701 = vsel %vm939, %v1675, %v1676
    %v1702 = vsel %vm939, %v1674, %v1675
    %v1703 = vsel %vm939, %v1673, %v1674
    %v1704 = vsel %vm939, %v1688, %v1673
    %v1705 = vsel %vm1052, %v1703, 0.0
    %v1706 = vsel %vm1053, %v1702, 0.0
    %v1707 = vsel %vm1054, %v1701, 0.0
    %v1708 = vsel %vm1055, %v1700, 0.0
    %v1709 = vsel %vm1056, %v1699, 0.0
    %v1710 = vsel %vm1057, %v1698, 0.0
    %v1711 = vsel %vm1058, %v1697, 0.0
    %v1712 = vsel %vm1059, %v1696, 0.0
    %v1713 = vsel %vm1060, %v1695, 0.0
    %v1714 = vsel %vm1061, %v1694, 0.0
    %v1715 = vsel %vm1062, %v1693, 0.0
    %v1716 = vsel %vm1063, %v1692, 0.0
    %v1717 = vsel %vm1064, %v1691, 0.0
    %v1718 = vsel %vm1065, %v1690, 0.0
    %v1719 = vsel %vm1066, %v1689, 0.0
    %v1720 = vsel %vm1067, %v1704, 0.0
    %v1721 = vpack.c.bf16 %v1706, %v1705
    %v1722 = vpack.c.bf16 %v1708, %v1707
    %v1723 = vpack.c.bf16 %v1710, %v1709
    %v1724 = vpack.c.bf16 %v1712, %v1711
    %v1725 = vpack.c.bf16 %v1714, %v1713
    %v1726 = vpack.c.bf16 %v1716, %v1715
    %v1727 = vpack.c.bf16 %v1718, %v1717
    %v1728 = vpack.c.bf16 %v1720, %v1719
    %s1729 = scalar_lea.vmem %s2, 32
    %v1730 = vld [vmem:[%s1729] sm:$0xf]
    %v1731 = vld [vmem:[%s1729 + $0x4] sm:$0xf]
    %v1732 = vld [vmem:[%s1729 + $0x8] sm:$0xf]
    %v1733 = vld [vmem:[%s1729 + $0xc] sm:$0xf]
    %v1738 = vunpack.c.l.b16 %v1730
    %v1739 = vunpack.c.l.b16 %v1731
    %v1740 = vunpack.c.l.b16 %v1732
    %v1741 = vunpack.c.l.b16 %v1733
    %v1742 = vpack.c.b16 %v1739, %v1738
    %v1743 = vpack.c.b16 %v1741, %v1740
    %v1747 = vsel %vm1514, %v1721, 0
    %v1750 = vsel %vm1514, %v1722, 0
    %v1753 = vsel %vm1514, %v1723, 0
    %v1756 = vsel %vm1514, %v1724, 0
    %v1759 = vsel %vm1514, %v1725, 0
    %v1762 = vsel %vm1514, %v1726, 0
    %v1765 = vsel %vm1514, %v1727, 0
    %v1768 = vsel %vm1514, %v1728, 0
    %1770 = vmatpush.bf16.msra.mxu0 0
    %1771 = vmatpush.bf16.msra.mxu0 0
    %1772 = vmatpush.bf16.msra.mxu0 0
    %1773 = vmatpush.bf16.msra.mxu0 0
    %1774 = vmatpush.bf16.msra.mxu0 0
    %1775 = vmatpush.bf16.msra.mxu0 0
    %1776 = vmatpush.bf16.msra.mxu0 %v1743
    %1777 = vmatpush.bf16.msra.mxu0 %v1742
    %1778 = vmatmul.bf16.gmra.mxu0 %v1747
    %v1779 = vpop.f32.mrf.mxu0
    %v1780 = vadd.f32 0.0, %v1779
    %v1781 = vpop.f32.mrf.mxu0
    %v1782 = vadd.f32 0.0, %v1781
    %1783 = vmatmul.bf16.gmra.mxu0 %v1750
    %v1784 = vpop.f32.mrf.mxu0
    %v1785 = vadd.f32 0.0, %v1784
    %v1786 = vpop.f32.mrf.mxu0
    %v1787 = vadd.f32 0.0, %v1786
    %1788 = vmatmul.bf16.gmra.mxu0 %v1753
    %v1789 = vpop.f32.mrf.mxu0
    %v1790 = vadd.f32 0.0, %v1789
    %v1791 = vpop.f32.mrf.mxu0
    %v1792 = vadd.f32 0.0, %v1791
    %1793 = vmatmul.bf16.gmra.mxu0 %v1756
    %v1794 = vpop.f32.mrf.mxu0
    %v1795 = vadd.f32 0.0, %v1794
    %v1796 = vpop.f32.mrf.mxu0
    %v1797 = vadd.f32 0.0, %v1796
    %1798 = vmatmul.bf16.gmra.mxu0 %v1759
    %v1799 = vpop.f32.mrf.mxu0
    %v1800 = vadd.f32 0.0, %v1799
    %v1801 = vpop.f32.mrf.mxu0
    %v1802 = vadd.f32 0.0, %v1801
    %1803 = vmatmul.bf16.gmra.mxu0 %v1762
    %v1804 = vpop.f32.mrf.mxu0
    %v1805 = vadd.f32 0.0, %v1804
    %v1806 = vpop.f32.mrf.mxu0
    %v1807 = vadd.f32 0.0, %v1806
    %1808 = vmatmul.bf16.gmra.mxu0 %v1765
    %v1809 = vpop.f32.mrf.mxu0
    %v1810 = vadd.f32 0.0, %v1809
    %v1811 = vpop.f32.mrf.mxu0
    %v1812 = vadd.f32 0.0, %v1811
    %1813 = vmatmul.bf16.gmra.mxu0 %v1768
    %v1814 = vpop.f32.mrf.mxu0
    %v1815 = vadd.f32 0.0, %v1814
    %v1816 = vpop.f32.mrf.mxu0
    %v1817 = vadd.f32 0.0, %v1816
    %1818 = vdwg.mxu0
    %v1819 = vadd.f32 %v1634, %v1780
    %v1820 = vadd.f32 %v1636, %v1782
    %v1821 = vadd.f32 %v1639, %v1785
    %v1822 = vadd.f32 %v1641, %v1787
    %v1823 = vadd.f32 %v1644, %v1790
    %v1824 = vadd.f32 %v1646, %v1792
    %v1825 = vadd.f32 %v1649, %v1795
    %v1826 = vadd.f32 %v1651, %v1797
    %v1827 = vadd.f32 %v1654, %v1800
    %v1828 = vadd.f32 %v1656, %v1802
    %v1829 = vadd.f32 %v1659, %v1805
    %v1830 = vadd.f32 %v1661, %v1807
    %v1831 = vadd.f32 %v1664, %v1810
    %v1832 = vadd.f32 %v1666, %v1812
    %v1833 = vadd.f32 %v1669, %v1815
    %v1834 = vadd.f32 %v1671, %v1817
    %v1835 = vmax.f32 %v1819, 0.0
    %v1836 = vmax.f32 %v1820, 0.0
    %v1837 = vmax.f32 %v1821, 0.0
    %v1838 = vmax.f32 %v1822, 0.0
    %v1839 = vmax.f32 %v1823, 0.0
    %v1840 = vmax.f32 %v1824, 0.0
    %v1841 = vmax.f32 %v1825, 0.0
    %v1842 = vmax.f32 %v1826, 0.0
    %v1843 = vmax.f32 %v1827, 0.0
    %v1844 = vmax.f32 %v1828, 0.0
    %v1845 = vmax.f32 %v1829, 0.0
    %v1846 = vmax.f32 %v1830, 0.0
    %v1847 = vmax.f32 %v1831, 0.0
    %v1848 = vmax.f32 %v1832, 0.0
    %v1849 = vmax.f32 %v1833, 0.0
    %v1850 = vmax.f32 %v1834, 0.0
    %v1851 = vsel %vm1514, %v1835, 0.0
    %v1852 = vsel %vm1514, %v1836, 0.0
    %v1853 = vadd.f32 %v1851, %v1852
    %v1854 = vrot.slane %v1853, 4
    %v1855 = vadd.f32 %v1853, %v1854
    %v1856 = vrot.slane %v1855, 2
    %v1857 = vadd.f32 %v1855, %v1856
    %v1858 = vrot.slane %v1857, 1
    %v1859 = vadd.f32 %v1857, %v1858
    %v1860 = vsel %vm1514, %v1837, 0.0
    %v1861 = vsel %vm1514, %v1838, 0.0
    %v1862 = vadd.f32 %v1860, %v1861
    %v1863 = vrot.slane %v1862, 4
    %v1864 = vadd.f32 %v1862, %v1863
    %v1865 = vrot.slane %v1864, 2
    %v1866 = vadd.f32 %v1864, %v1865
    %v1867 = vrot.slane %v1866, 1
    %v1868 = vadd.f32 %v1866, %v1867
    %v1869 = vsel %vm1514, %v1839, 0.0
    %v1870 = vsel %vm1514, %v1840, 0.0
    %v1871 = vadd.f32 %v1869, %v1870
    %v1872 = vrot.slane %v1871, 4
    %v1873 = vadd.f32 %v1871, %v1872
    %v1874 = vrot.slane %v1873, 2
    %v1875 = vadd.f32 %v1873, %v1874
    %v1876 = vrot.slane %v1875, 1
    %v1877 = vadd.f32 %v1875, %v1876
    %v1878 = vsel %vm1514, %v1841, 0.0
    %v1879 = vsel %vm1514, %v1842, 0.0
    %v1880 = vadd.f32 %v1878, %v1879
    %v1881 = vrot.slane %v1880, 4
    %v1882 = vadd.f32 %v1880, %v1881
    %v1883 = vrot.slane %v1882, 2
    %v1884 = vadd.f32 %v1882, %v1883
    %v1885 = vrot.slane %v1884, 1
    %v1886 = vadd.f32 %v1884, %v1885
    %v1887 = vsel %vm1514, %v1843, 0.0
    %v1888 = vsel %vm1514, %v1844, 0.0
    %v1889 = vadd.f32 %v1887, %v1888
    %v1890 = vrot.slane %v1889, 4
    %v1891 = vadd.f32 %v1889, %v1890
    %v1892 = vrot.slane %v1891, 2
    %v1893 = vadd.f32 %v1891, %v1892
    %v1894 = vrot.slane %v1893, 1
    %v1895 = vadd.f32 %v1893, %v1894
    %v1896 = vsel %vm1514, %v1845, 0.0
    %v1897 = vsel %vm1514, %v1846, 0.0
    %v1898 = vadd.f32 %v1896, %v1897
    %v1899 = vrot.slane %v1898, 4
    %v1900 = vadd.f32 %v1898, %v1899
    %v1901 = vrot.slane %v1900, 2
    %v1902 = vadd.f32 %v1900, %v1901
    %v1903 = vrot.slane %v1902, 1
    %v1904 = vadd.f32 %v1902, %v1903
    %v1905 = vsel %vm1514, %v1847, 0.0
    %v1906 = vsel %vm1514, %v1848, 0.0
    %v1907 = vadd.f32 %v1905, %v1906
    %v1908 = vrot.slane %v1907, 4
    %v1909 = vadd.f32 %v1907, %v1908
    %v1910 = vrot.slane %v1909, 2
    %v1911 = vadd.f32 %v1909, %v1910
    %v1912 = vrot.slane %v1911, 1
    %v1913 = vadd.f32 %v1911, %v1912
    %v1914 = vsel %vm1514, %v1849, 0.0
    %v1915 = vsel %vm1514, %v1850, 0.0
    %v1916 = vadd.f32 %v1914, %v1915
    %v1917 = vrot.slane %v1916, 4
    %v1918 = vadd.f32 %v1916, %v1917
    %v1919 = vrot.slane %v1918, 2
    %v1920 = vadd.f32 %v1918, %v1919
    %v1921 = vrot.slane %v1920, 1
    %v1922 = vadd.f32 %v1920, %v1921
    %v1923 = vmul.f32 %v1859, 0.0625
    %v1924 = vmul.f32 %v1868, 0.0625
    %v1925 = vmul.f32 %v1877, 0.0625
    %v1926 = vmul.f32 %v1886, 0.0625
    %v1927 = vmul.f32 %v1895, 0.0625
    %v1928 = vmul.f32 %v1904, 0.0625
    %v1929 = vmul.f32 %v1913, 0.0625
    %v1930 = vmul.f32 %v1922, 0.0625
    %v1931 = vpack.c.bf16 %v1923, %v1923
    %v1932 = vpack.c.bf16 %v1924, %v1924
    %v1933 = vpack.c.bf16 %v1925, %v1925
    %v1934 = vpack.c.bf16 %v1926, %v1926
    %v1935 = vpack.c.bf16 %v1927, %v1927
    %v1936 = vpack.c.bf16 %v1928, %v1928
    %v1937 = vpack.c.bf16 %v1929, %v1929
    %v1938 = vpack.c.bf16 %v1930, %v1930
    %v1939 = vld [vmem:[%s3] sm:$0xf]
    %v1940 = vld [vmem:[%s3 + $0x4] sm:$0xf]
    %v1941 = vld [vmem:[%s3 + $0x8] sm:$0xf]
    %v1942 = vld [vmem:[%s3 + $0xc] sm:$0xf]
    %v1943 = vld [vmem:[%s4] sm:$0x1]
    %v1945 = vperm.slane %v1943, 0
    %v1955 = vunpack.c.l.b16 %v1931
    %v1956 = vunpack.c.l.b16 %v1932
    %v1957 = vunpack.c.l.b16 %v1933
    %v1958 = vunpack.c.l.b16 %v1934
    %v1959 = vunpack.c.l.b16 %v1935
    %v1960 = vunpack.c.l.b16 %v1936
    %v1961 = vunpack.c.l.b16 %v1937
    %v1962 = vunpack.c.l.b16 %v1938
    %vm1963 = vcmask 1041409
    %v1964 = vsel %vm1963, %v1956, %v1955
    %vm1965 = vcmask 1042434
    %v1966 = vsel %vm1965, %v1957, %v1964
    %vm1967 = vcmask 1043459
    %v1968 = vsel %vm1967, %v1958, %v1966
    %vm1969 = vcmask 1044484
    %v1970 = vsel %vm1969, %v1959, %v1968
    %vm1971 = vcmask 1045509
    %v1972 = vsel %vm1971, %v1960, %v1970
    %vm1973 = vcmask 1046534
    %v1974 = vsel %vm1973, %v1961, %v1972
    %vm1975 = vcmask 1047559
    %v1976 = vsel %vm1975, %v1962, %v1974
    %v1977 = vpack.c.b16 %v1976, %v1976
    %v1982 = vunpack.c.l.b16 %v1939
    %v1983 = vunpack.c.l.b16 %v1940
    %v1984 = vunpack.c.l.b16 %v1941
    %v1985 = vunpack.c.l.b16 %v1942
    %v1986 = vpack.c.b16 %v1983, %v1982
    %v1987 = vpack.c.b16 %v1985, %v1984
    %v1991 = vsel %vm1514, %v1977, 0
    %1993 = vmatpush.bf16.msra.mxu0 0
    %1994 = vmatpush.bf16.msra.mxu0 0
    %1995 = vmatpush.bf16.msra.mxu0 0
    %1996 = vmatpush.bf16.msra.mxu0 0
    %1997 = vmatpush.bf16.msra.mxu0 0
    %1998 = vmatpush.bf16.msra.mxu0 0
    %1999 = vmatpush.bf16.msra.mxu0 %v1987
    %2000 = vmatpush.bf16.msra.mxu0 %v1986
    %2001 = vmatmul.bf16.gmra.mxu0 %v1991
    %v2002 = vpop.f32.mrf.mxu0
    %v2003 = vadd.f32 %v1945, %v2002
    %v2004 = vpop.f32.mrf.mxu0
    %2005 = vdwg.mxu0
    %v2006 = vmax.f32 %v2003, 0.0
    %2007 = vst [vmem:[#allocation2] sm:$0xff] %v2006
    // Predicated region
    $region22: #{tpu_custom_call.1} parent=1 // pred_check
      _
    $region23: #{tpu_custom_call.1} parent=1 // pred_check_branch
      %2009 = sbr.rel (0) target = $region25
    $region24: #{tpu_custom_call.1} parent=1 // pred_region
      %2011 = vsyncadd [#allocation3], 0
      %s2013 = sshll.u32 [#allocation2], 4
      %s2014 = int_to_ptr.vmem [resolvable:$true] %s2013
      %s2015 = sshll.u32 %s5, 4
      %s2016 = int_to_ptr.hbm [resolvable:$true] %s2015
      %2018 = dma.vmem_to_hbm [thread:$0]  %s2014, 128, %s2016, [#allocation3]
    $region25: #{tpu_custom_call.1} parent=1 // pred_fallthru
      _
    // Predicated region
    $region26: #{tpu_custom_call.1} parent=1 // pred_check
      _
    $region27: #{tpu_custom_call.1} parent=1 // pred_check_branch
      %2020 = sbr.rel (0) target = $region29
    $region28: #{tpu_custom_call.1} parent=1 // pred_region
      %2022 = dma.done [#allocation3], 128
    $region29: #{tpu_custom_call.1} parent=1 // pred_fallthru
      _
    %2023 = vsyncpa [#allocation3], 1

</llo_original>
